<compile_context>
chip_gen: v6e
topology: v6e:2x2x1
jax: 0.10.0
libtpu: 0.0.40
codegen_flags: <defaults>
</compile_context>

<pallas_src>
import math
import functools

import jax
import jax.numpy as jnp
from jax import lax
from jax.experimental import pallas as pl
from jax.experimental.pallas import tpu as pltpu


def _round_up(v, m):
    return ((v + m - 1) // m) * m


def _pad2(a, rows, cols, dtype):
    r, c = a.shape
    return jnp.pad(a, ((0, rows - r), (0, cols - c))).astype(dtype)


# ----------------------------------------------------------------------------
# Fused kernel: one grid step per episode (grid axis is fully parallel).
# ----------------------------------------------------------------------------
def _fused_encoder_kernel(x_ref, we_ref, be_ref, w1t_ref, w1b_ref, w2_ref,
                          w3m_ref, w3v_ref, z_ref, latent_ref, kl_ref,
                          *, way, shot, hid):
    n = way * shot                       # samples per episode
    p = shot * n                         # pair rows averaged per (episode, way)
    hp = latent_ref.shape[-1]            # padded hid dim (lanes)
    h2p = w2_ref.shape[-1]               # padded 2*hid dim (lanes)

    # ---- encoder Linear: (n, Fp) @ (Fp, Hp) + b   (bf16 MXU, f32 accumulate)
    out = jnp.dot(x_ref[0], we_ref[...],
                  preferred_element_type=jnp.float32) + be_ref[...]
    out_b = out.astype(jnp.bfloat16)                                     # (n, hp)

    # ---- relation layer 1 via the W1 split (no pair blow-up before the ReLU)
    proj1 = jnp.dot(out_b, w1t_ref[...], preferred_element_type=jnp.float32)
    proj2 = jnp.dot(out_b, w1b_ref[...], preferred_element_type=jnp.float32)
    # pair (i, j): pre-activation = proj1[i] + proj2[j]   -> (n, n, h2p)
    pre = proj1[:, None, :] + proj2[None, :, :]
    h1 = jnp.maximum(pre, 0.0).reshape(n * n, h2p).astype(jnp.bfloat16)

    # ---- relation layers 2 & 3 (layer 3 split into mean / var halves) ----
    h2 = jnp.maximum(
        jnp.dot(h1, w2_ref[...], preferred_element_type=jnp.float32), 0.0)
    h2b = h2.astype(jnp.bfloat16)
    h3m = jnp.maximum(
        jnp.dot(h2b, w3m_ref[...], preferred_element_type=jnp.float32), 0.0)
    h3v = jnp.maximum(
        jnp.dot(h2b, w3v_ref[...], preferred_element_type=jnp.float32), 0.0)

    # ---- per-(episode, way) mean over the p contiguous pair rows ----
    inv_p = 1.0 / p
    mean = jnp.sum(h3m.reshape(way, p, hp), axis=1) * inv_p              # (way, hp)
    var = jnp.sum(h3v.reshape(way, p, hp), axis=1) * inv_p               # (way, hp)

    # ---- reparameterized sample ----
    latent = mean + var * z_ref[0]
    latent_ref[0] = latent

    # ---- KL( N(latent; mean, var) || N(latent; 0, 1) ), per-episode partial
    eps = 1e-20
    # the 0.5*log(2*pi) normalizers cancel between the two log-probs
    lp1 = -0.5 * ((latent - mean) / (var + eps)) ** 2 - jnp.log(var + eps)
    lp0 = -0.5 * (latent / (1.0 + eps)) ** 2 - math.log(1.0 + eps)
    diff = lp1 - lp0
    if hid != hp:                                                        # static
        lane = lax.broadcasted_iota(jnp.int32, (way, hp), 1)
        diff = jnp.where(lane < hid, diff, 0.0)                          # mask pad
    partial = jnp.sum(jnp.sum(diff, axis=1, keepdims=True),
                      axis=0, keepdims=True)                             # (1, 1)
    # broadcast the scalar across the lane-dense KL slot for this episode
    kl_ref[0] = jnp.zeros((1, kl_ref.shape[-1]), jnp.float32) + partial


# ----------------------------------------------------------------------------
# Full Encoder forward (padding / weight splitting is layout plumbing only)
# ----------------------------------------------------------------------------
@functools.partial(jax.jit, static_argnames=("way_num", "shot_num", "hid_dim"))
def encoder_forward(x, params, z, *, way_num, shot_num, hid_dim):
    e_sz, n, feat = x.shape
    assert n == way_num * shot_num
    h = hid_dim
    fp = _round_up(feat, 128)
    hp = _round_up(h, 128)
    h2p = _round_up(2 * h, 128)

    # pad feature dims to 128 lanes; cast matmul operands to bf16
    x_p = jnp.pad(x, ((0, 0), (0, 0), (0, fp - feat))).astype(jnp.bfloat16)
    we = _pad2(params["w_enc"], fp, hp, jnp.bfloat16)
    be = _pad2(params["b_enc"], 1, hp, jnp.float32)
    w1 = params["w1"]
    w1t = _pad2(w1[:h, :], hp, h2p, jnp.bfloat16)    # acts on the t1 half
    w1b = _pad2(w1[h:, :], hp, h2p, jnp.bfloat16)    # acts on the t2 half
    w2 = _pad2(params["w2"], h2p, h2p, jnp.bfloat16)
    w3 = params["w3"]
    w3m = _pad2(w3[:, :h], h2p, hp, jnp.bfloat16)    # "mean" output half
    w3v = _pad2(w3[:, h:], h2p, hp, jnp.bfloat16)    # "var" output half
    z_p = jnp.pad(z, ((0, 0), (0, 0), (0, hp - h))).astype(jnp.float32)

    kernel = functools.partial(
        _fused_encoder_kernel, way=way_num, shot=shot_num, hid=h)

    latent_p, kl_part = pl.pallas_call(
        kernel,
        out_shape=(
            jax.ShapeDtypeStruct((e_sz, way_num, hp), jnp.float32),
            jax.ShapeDtypeStruct((e_sz, 1, 128), jnp.float32),
        ),
        grid=(e_sz,),
        in_specs=[
            pl.BlockSpec((1, n, fp), lambda e: (e, 0, 0)),        # x, per episode
            pl.BlockSpec((fp, hp), lambda e: (0, 0)),             # w_enc
            pl.BlockSpec((1, hp), lambda e: (0, 0)),              # b_enc
            pl.BlockSpec((hp, h2p), lambda e: (0, 0)),            # w1 top half
            pl.BlockSpec((hp, h2p), lambda e: (0, 0)),            # w1 bottom half
            pl.BlockSpec((h2p, h2p), lambda e: (0, 0)),           # w2
            pl.BlockSpec((h2p, hp), lambda e: (0, 0)),            # w3 mean half
            pl.BlockSpec((h2p, hp), lambda e: (0, 0)),            # w3 var half
            pl.BlockSpec((1, way_num, hp), lambda e: (e, 0, 0)),  # z, per episode
        ],
        out_specs=(
            pl.BlockSpec((1, way_num, hp), lambda e: (e, 0, 0)),  # latent
            pl.BlockSpec((1, 1, 128), lambda e: (e, 0, 0)),       # per-episode KL
        ),
        compiler_params=pltpu.CompilerParams(
            dimension_semantics=("parallel",)),                   # episodes independent
    )(x_p, we, be, w1t, w1b, w2, w3m, w3v, z_p)

    latent = latent_p[:, :, :h]
    kl = jnp.sum(kl_part[:, 0, 0]) / float(e_sz * way_num * h)    # final mean
    return latent, kl


# ----------------------------------------------------------------------------
# Deterministic parameter / input construction and smoke test
# ----------------------------------------------------------------------------
def init_params(key, feat_dim, hid_dim):
    k1, k2, k3, k4, k5 = jax.random.split(key, 5)
    bnd_enc = 1.0 / math.sqrt(feat_dim)
    bnd_rel = 1.0 / math.sqrt(2 * hid_dim)
    return {
        # encoder_func: Linear(feat_dim, hid_dim) stored as (F, H) + bias (1, H)
        "w_enc": jax.random.uniform(k1, (feat_dim, hid_dim), jnp.float32, -bnd_enc, bnd_enc),
        "b_enc": jax.random.uniform(k2, (1, hid_dim), jnp.float32, -bnd_enc, bnd_enc),
        # relation_net: three Linear(2H, 2H, bias=False) stored as (2H, 2H), y = x @ W
        "w1": jax.random.uniform(k3, (2 * hid_dim, 2 * hid_dim), jnp.float32, -bnd_rel, bnd_rel),
        "w2": jax.random.uniform(k4, (2 * hid_dim, 2 * hid_dim), jnp.float32, -bnd_rel, bnd_rel),
        "w3": jax.random.uniform(k5, (2 * hid_dim, 2 * hid_dim), jnp.float32, -bnd_rel, bnd_rel),
    }


if __name__ == "__main__":
    way_num, shot_num = 4, 2
    feat_dim, hid_dim = 32, 32
    episode_size = 2

    key = jax.random.PRNGKey(0)
    kx, kp, kz = jax.random.split(key, 3)

    x = jax.random.normal(
        kx, (episode_size, way_num * shot_num, feat_dim), jnp.float32)
    params = init_params(kp, feat_dim, hid_dim)
    # TODO(synk): torch.normal(0, 1, mean.size()) replaced by a deterministic
    # host-side jax.random draw passed in as `z` (no in-kernel RNG needed).
    z = jax.random.normal(kz, (episode_size, way_num, hid_dim), jnp.float32)

    latent, kl_div = encoder_forward(
        x, params, z, way_num=way_num, shot_num=shot_num, hid_dim=hid_dim)
    jax.block_until_ready((latent, kl_div))

    assert latent.shape == (episode_size, way_num, hid_dim)
    assert kl_div.shape == ()
    assert bool(jnp.all(jnp.isfinite(latent)))
    assert bool(jnp.isfinite(kl_div))
    print("KERNEL_OK")
</pallas_src>

<mosaic_0001>
module attributes {stable_mosaic.version = 11 : i64} {
  func.func @_fused_encoder_kernel(%arg0: i32, %arg1: memref<1x8x128xbf16, #tpu.memory_space<vmem>>, %arg2: memref<128x128xbf16, #tpu.memory_space<vmem>>, %arg3: memref<1x128xf32, #tpu.memory_space<vmem>>, %arg4: memref<128x128xbf16, #tpu.memory_space<vmem>>, %arg5: memref<128x128xbf16, #tpu.memory_space<vmem>>, %arg6: memref<128x128xbf16, #tpu.memory_space<vmem>>, %arg7: memref<128x128xbf16, #tpu.memory_space<vmem>>, %arg8: memref<128x128xbf16, #tpu.memory_space<vmem>>, %arg9: memref<1x4x128xf32, #tpu.memory_space<vmem>>, %arg10: memref<1x4x128xf32, #tpu.memory_space<vmem>>, %arg11: memref<1x1x128xf32, #tpu.memory_space<vmem>>) attributes {dimension_semantics = [#tpu.dimension_semantics<parallel>], iteration_bounds = array<i64: 2>, scalar_prefetch = 0 : i64, scratch_operands = 0 : i64, tpu.core_type = #tpu.core_type<tc>, window_params = [{transform_indices = @transform_0, window_bounds = array<i64: 1, 8, 128>}, {pipeline_mode = #tpu.pipeline_mode<synchronous>, transform_indices = @transform_1, window_bounds = array<i64: 128, 128>}, {pipeline_mode = #tpu.pipeline_mode<synchronous>, transform_indices = @transform_2, window_bounds = array<i64: 1, 128>}, {pipeline_mode = #tpu.pipeline_mode<synchronous>, transform_indices = @transform_3, window_bounds = array<i64: 128, 128>}, {pipeline_mode = #tpu.pipeline_mode<synchronous>, transform_indices = @transform_4, window_bounds = array<i64: 128, 128>}, {pipeline_mode = #tpu.pipeline_mode<synchronous>, transform_indices = @transform_5, window_bounds = array<i64: 128, 128>}, {pipeline_mode = #tpu.pipeline_mode<synchronous>, transform_indices = @transform_6, window_bounds = array<i64: 128, 128>}, {pipeline_mode = #tpu.pipeline_mode<synchronous>, transform_indices = @transform_7, window_bounds = array<i64: 128, 128>}, {transform_indices = @transform_8, window_bounds = array<i64: 1, 4, 128>}, {transform_indices = @transform_9, window_bounds = array<i64: 1, 4, 128>}, {transform_indices = @transform_10, window_bounds = array<i64: 1, 1, 128>}]} {
    %c0 = arith.constant 0 : index
    %c0_0 = arith.constant 0 : index
    %c0_1 = arith.constant 0 : index
    %0 = vector.load %arg1[%c0, %c0_0, %c0_1] : memref<1x8x128xbf16, #tpu.memory_space<vmem>>, vector<1x8x128xbf16>
    %1 = vector.shape_cast %0 : vector<1x8x128xbf16> to vector<8x128xbf16>
    %c0_2 = arith.constant 0 : index
    %c0_3 = arith.constant 0 : index
    %2 = vector.load %arg2[%c0_2, %c0_3] : memref<128x128xbf16, #tpu.memory_space<vmem>>, vector<128x128xbf16>
    %cst = arith.constant dense<0.000000e+00> : vector<8x128xf32>
    %3 = tpu.matmul %1, %2, %cst {dimension_numbers = #tpu.dot_dimension_numbers<[1], [0], [0], [1], [0, 0, 1, 1], [], []>} : vector<8x128xbf16>, vector<128x128xbf16>, vector<8x128xf32> -> vector<8x128xf32>
    %c0_4 = arith.constant 0 : index
    %c0_5 = arith.constant 0 : index
    %4 = vector.load %arg3[%c0_4, %c0_5] : memref<1x128xf32, #tpu.memory_space<vmem>>, vector<1x128xf32>
    %5 = vector.broadcast %4 : vector<1x128xf32> to vector<8x128xf32>
    %6 = arith.addf %3, %5 : vector<8x128xf32>
    %7 = arith.truncf %6 : vector<8x128xf32> to vector<8x128xbf16>
    %c0_6 = arith.constant 0 : index
    %c0_7 = arith.constant 0 : index
    %8 = vector.load %arg4[%c0_6, %c0_7] : memref<128x128xbf16, #tpu.memory_space<vmem>>, vector<128x128xbf16>
    %cst_8 = arith.constant dense<0.000000e+00> : vector<8x128xf32>
    %9 = tpu.matmul %7, %8, %cst_8 {dimension_numbers = #tpu.dot_dimension_numbers<[1], [0], [0], [1], [0, 0, 1, 1], [], []>} : vector<8x128xbf16>, vector<128x128xbf16>, vector<8x128xf32> -> vector<8x128xf32>
    %c0_9 = arith.constant 0 : index
    %c0_10 = arith.constant 0 : index
    %10 = vector.load %arg5[%c0_9, %c0_10] : memref<128x128xbf16, #tpu.memory_space<vmem>>, vector<128x128xbf16>
    %cst_11 = arith.constant dense<0.000000e+00> : vector<8x128xf32>
    %11 = tpu.matmul %7, %10, %cst_11 {dimension_numbers = #tpu.dot_dimension_numbers<[1], [0], [0], [1], [0, 0, 1, 1], [], []>} : vector<8x128xbf16>, vector<128x128xbf16>, vector<8x128xf32> -> vector<8x128xf32>
    %12 = vector.shape_cast %9 : vector<8x128xf32> to vector<8x1x128xf32>
    %13 = vector.shape_cast %11 : vector<8x128xf32> to vector<1x8x128xf32>
    %14 = vector.broadcast %12 : vector<8x1x128xf32> to vector<8x8x128xf32>
    %15 = vector.broadcast %13 : vector<1x8x128xf32> to vector<8x8x128xf32>
    %16 = arith.addf %14, %15 : vector<8x8x128xf32>
    %cst_12 = arith.constant 0.000000e+00 : f32
    %17 = vector.broadcast %cst_12 : f32 to vector<8x8x128xf32>
    %18 = arith.maximumf %16, %17 : vector<8x8x128xf32>
    %19 = vector.shape_cast %18 : vector<8x8x128xf32> to vector<64x128xf32>
    %20 = arith.truncf %19 : vector<64x128xf32> to vector<64x128xbf16>
    %c0_13 = arith.constant 0 : index
    %c0_14 = arith.constant 0 : index
    %21 = vector.load %arg6[%c0_13, %c0_14] : memref<128x128xbf16, #tpu.memory_space<vmem>>, vector<128x128xbf16>
    %cst_15 = arith.constant dense<0.000000e+00> : vector<64x128xf32>
    %22 = tpu.matmul %20, %21, %cst_15 {dimension_numbers = #tpu.dot_dimension_numbers<[1], [0], [0], [1], [0, 0, 1, 1], [], []>} : vector<64x128xbf16>, vector<128x128xbf16>, vector<64x128xf32> -> vector<64x128xf32>
    %cst_16 = arith.constant 0.000000e+00 : f32
    %23 = vector.broadcast %cst_16 : f32 to vector<64x128xf32>
    %24 = arith.maximumf %22, %23 : vector<64x128xf32>
    %25 = arith.truncf %24 : vector<64x128xf32> to vector<64x128xbf16>
    %c0_17 = arith.constant 0 : index
    %c0_18 = arith.constant 0 : index
    %26 = vector.load %arg7[%c0_17, %c0_18] : memref<128x128xbf16, #tpu.memory_space<vmem>>, vector<128x128xbf16>
    %cst_19 = arith.constant dense<0.000000e+00> : vector<64x128xf32>
    %27 = tpu.matmul %25, %26, %cst_19 {dimension_numbers = #tpu.dot_dimension_numbers<[1], [0], [0], [1], [0, 0, 1, 1], [], []>} : vector<64x128xbf16>, vector<128x128xbf16>, vector<64x128xf32> -> vector<64x128xf32>
    %cst_20 = arith.constant 0.000000e+00 : f32
    %28 = vector.broadcast %cst_20 : f32 to vector<64x128xf32>
    %29 = arith.maximumf %27, %28 : vector<64x128xf32>
    %c0_21 = arith.constant 0 : index
    %c0_22 = arith.constant 0 : index
    %30 = vector.load %arg8[%c0_21, %c0_22] : memref<128x128xbf16, #tpu.memory_space<vmem>>, vector<128x128xbf16>
    %cst_23 = arith.constant dense<0.000000e+00> : vector<64x128xf32>
    %31 = tpu.matmul %25, %30, %cst_23 {dimension_numbers = #tpu.dot_dimension_numbers<[1], [0], [0], [1], [0, 0, 1, 1], [], []>} : vector<64x128xbf16>, vector<128x128xbf16>, vector<64x128xf32> -> vector<64x128xf32>
    %cst_24 = arith.constant 0.000000e+00 : f32
    %32 = vector.broadcast %cst_24 : f32 to vector<64x128xf32>
    %33 = arith.maximumf %31, %32 : vector<64x128xf32>
    %34 = vector.shape_cast %29 : vector<64x128xf32> to vector<4x16x128xf32>
    %cst_25 = arith.constant dense<0.000000e+00> : vector<4x128xf32>
    %35 = vector.multi_reduction <add>, %34, %cst_25 [1] : vector<4x16x128xf32> to vector<4x128xf32>
    %cst_26 = arith.constant 6.250000e-02 : f32
    %36 = vector.broadcast %cst_26 : f32 to vector<4x128xf32>
    %37 = arith.mulf %35, %36 : vector<4x128xf32>
    %38 = vector.shape_cast %33 : vector<64x128xf32> to vector<4x16x128xf32>
    %cst_27 = arith.constant dense<0.000000e+00> : vector<4x128xf32>
    %39 = vector.multi_reduction <add>, %38, %cst_27 [1] : vector<4x16x128xf32> to vector<4x128xf32>
    %cst_28 = arith.constant 6.250000e-02 : f32
    %40 = vector.broadcast %cst_28 : f32 to vector<4x128xf32>
    %41 = arith.mulf %39, %40 : vector<4x128xf32>
    %c0_29 = arith.constant 0 : index
    %c0_30 = arith.constant 0 : index
    %c0_31 = arith.constant 0 : index
    %42 = vector.load %arg9[%c0_29, %c0_30, %c0_31] : memref<1x4x128xf32, #tpu.memory_space<vmem>>, vector<1x4x128xf32>
    %43 = vector.shape_cast %42 : vector<1x4x128xf32> to vector<4x128xf32>
    %44 = arith.mulf %41, %43 : vector<4x128xf32>
    %45 = arith.addf %37, %44 : vector<4x128xf32>
    %c0_32 = arith.constant 0 : index
    %c0_33 = arith.constant 0 : index
    %c0_34 = arith.constant 0 : index
    %46 = vector.load %arg10[%c0_32, %c0_33, %c0_34] : memref<1x4x128xf32, #tpu.memory_space<vmem>>, vector<1x4x128xf32>
    %47 = vector.shape_cast %46 : vector<1x4x128xf32> to vector<4x128xf32>
    %48 = vector.shape_cast %45 : vector<4x128xf32> to vector<1x4x128xf32>
    tpu.vector_store %arg10[%c0_32, %c0_33, %c0_34], %48 {strides = array<i32>} : memref<1x4x128xf32, #tpu.memory_space<vmem>>, vector<1x4x128xf32>,
    %49 = arith.subf %45, %37 : vector<4x128xf32>
    %cst_35 = arith.constant 9.99999968E-21 : f32
    %50 = vector.broadcast %cst_35 : f32 to vector<4x128xf32>
    %51 = arith.addf %41, %50 : vector<4x128xf32>
    %52 = arith.divf %49, %51 : vector<4x128xf32>
    %53 = arith.mulf %52, %52 : vector<4x128xf32>
    %cst_36 = arith.constant -5.000000e-01 : f32
    %54 = vector.broadcast %cst_36 : f32 to vector<4x128xf32>
    %55 = arith.mulf %54, %53 : vector<4x128xf32>
    %cst_37 = arith.constant 9.99999968E-21 : f32
    %56 = vector.broadcast %cst_37 : f32 to vector<4x128xf32>
    %57 = arith.addf %41, %56 : vector<4x128xf32>
    %58 = math.log %57 : vector<4x128xf32>
    %59 = arith.subf %55, %58 : vector<4x128xf32>
    %cst_38 = arith.constant 1.000000e+00 : f32
    %60 = vector.broadcast %cst_38 : f32 to vector<4x128xf32>
    %61 = arith.divf %45, %60 : vector<4x128xf32>
    %62 = arith.mulf %61, %61 : vector<4x128xf32>
    %cst_39 = arith.constant -5.000000e-01 : f32
    %63 = vector.broadcast %cst_39 : f32 to vector<4x128xf32>
    %64 = arith.mulf %63, %62 : vector<4x128xf32>
    %cst_40 = arith.constant 0.000000e+00 : f32
    %65 = vector.broadcast %cst_40 : f32 to vector<4x128xf32>
    %66 = arith.subf %64, %65 : vector<4x128xf32>
    %67 = arith.subf %59, %66 : vector<4x128xf32>
    %68 = tpu.iota {dimensions = array<i32: 1>} : vector<4x128xi32>
    %c32_i32 = arith.constant 32 : i32
    %69 = vector.broadcast %c32_i32 : i32 to vector<4x128xi32>
    %70 = arith.cmpi slt, %68, %69 : vector<4x128xi32>
    %cst_41 = arith.constant 0.000000e+00 : f32
    %71 = vector.broadcast %cst_41 : f32 to vector<4x128xf32>
    %72 = arith.select %70, %67, %71 : vector<4x128xi1>, vector<4x128xf32>
    %cst_42 = arith.constant dense<0.000000e+00> : vector<4xf32>
    %73 = vector.multi_reduction <add>, %72, %cst_42 [1] : vector<4x128xf32> to vector<4xf32>
    %74 = vector.shape_cast %73 : vector<4xf32> to vector<4x1xf32>
    %cst_43 = arith.constant dense<0.000000e+00> : vector<1xf32>
    %75 = vector.multi_reduction <add>, %74, %cst_43 [0] : vector<4x1xf32> to vector<1xf32>
    %76 = vector.shape_cast %75 : vector<1xf32> to vector<1x1xf32>
    %cst_44 = arith.constant 0.000000e+00 : f32
    %77 = vector.broadcast %cst_44 : f32 to vector<1x128xf32>
    %78 = vector.broadcast %76 : vector<1x1xf32> to vector<1x128xf32>
    %79 = arith.addf %77, %78 : vector<1x128xf32>
    %c0_45 = arith.constant 0 : index
    %c0_46 = arith.constant 0 : index
    %c0_47 = arith.constant 0 : index
    %80 = vector.load %arg11[%c0_45, %c0_46, %c0_47] : memref<1x1x128xf32, #tpu.memory_space<vmem>>, vector<1x1x128xf32>
    %81 = vector.shape_cast %80 : vector<1x1x128xf32> to vector<1x128xf32>
    %82 = vector.shape_cast %79 : vector<1x128xf32> to vector<1x1x128xf32>
    tpu.vector_store %arg11[%c0_45, %c0_46, %c0_47], %82 {strides = array<i32>} : memref<1x1x128xf32, #tpu.memory_space<vmem>>, vector<1x1x128xf32>,
    return
  }
  func.func @transform_0(%arg0: i32) -> (i32, i32, i32) {
    %c0_i32 = arith.constant 0 : i32
    %c0_i32_0 = arith.constant 0 : i32
    %c0_i32_1 = arith.constant 0 : i32
    return %arg0, %c0_i32, %c0_i32_0 : i32, i32, i32
  }
  func.func @transform_1(%arg0: i32) -> (i32, i32) {
    %c0_i32 = arith.constant 0 : i32
    %c0_i32_0 = arith.constant 0 : i32
    %c0_i32_1 = arith.constant 0 : i32
    return %c0_i32, %c0_i32_0 : i32, i32
  }
  func.func @transform_2(%arg0: i32) -> (i32, i32) {
    %c0_i32 = arith.constant 0 : i32
    %c0_i32_0 = arith.constant 0 : i32
    %c0_i32_1 = arith.constant 0 : i32
    return %c0_i32, %c0_i32_0 : i32, i32
  }
  func.func @transform_3(%arg0: i32) -> (i32, i32) {
    %c0_i32 = arith.constant 0 : i32
    %c0_i32_0 = arith.constant 0 : i32
    %c0_i32_1 = arith.constant 0 : i32
    return %c0_i32, %c0_i32_0 : i32, i32
  }
  func.func @transform_4(%arg0: i32) -> (i32, i32) {
    %c0_i32 = arith.constant 0 : i32
    %c0_i32_0 = arith.constant 0 : i32
    %c0_i32_1 = arith.constant 0 : i32
    return %c0_i32, %c0_i32_0 : i32, i32
  }
  func.func @transform_5(%arg0: i32) -> (i32, i32) {
    %c0_i32 = arith.constant 0 : i32
    %c0_i32_0 = arith.constant 0 : i32
    %c0_i32_1 = arith.constant 0 : i32
    return %c0_i32, %c0_i32_0 : i32, i32
  }
  func.func @transform_6(%arg0: i32) -> (i32, i32) {
    %c0_i32 = arith.constant 0 : i32
    %c0_i32_0 = arith.constant 0 : i32
    %c0_i32_1 = arith.constant 0 : i32
    return %c0_i32, %c0_i32_0 : i32, i32
  }
  func.func @transform_7(%arg0: i32) -> (i32, i32) {
    %c0_i32 = arith.constant 0 : i32
    %c0_i32_0 = arith.constant 0 : i32
    %c0_i32_1 = arith.constant 0 : i32
    return %c0_i32, %c0_i32_0 : i32, i32
  }
  func.func @transform_8(%arg0: i32) -> (i32, i32, i32) {
    %c0_i32 = arith.constant 0 : i32
    %c0_i32_0 = arith.constant 0 : i32
    %c0_i32_1 = arith.constant 0 : i32
    return %arg0, %c0_i32, %c0_i32_0 : i32, i32, i32
  }
  func.func @transform_9(%arg0: i32) -> (i32, i32, i32) {
    %c0_i32 = arith.constant 0 : i32
    %c0_i32_0 = arith.constant 0 : i32
    %c0_i32_1 = arith.constant 0 : i32
    return %arg0, %c0_i32, %c0_i32_0 : i32, i32, i32
  }
  func.func @transform_10(%arg0: i32) -> (i32, i32, i32) {
    %c0_i32 = arith.constant 0 : i32
    %c0_i32_0 = arith.constant 0 : i32
    %c0_i32_1 = arith.constant 0 : i32
    return %arg0, %c0_i32, %c0_i32_0 : i32, i32, i32
  }
}

</mosaic_0001>

<llo_original>
// kernel: encoder_forward.1
$region0: #{encoder_forward.1}
  #allocation0 [shape = 'u32[]', space=smem, size = 0x4, offset = 0x4, fixed_abs, tag = 'smem constant byte address 0x4 - core index']
  #allocation1 [shape = 'u32[144,128]{1,0:T(1,128)}', space=vmem, size = 0x12000, scoped, tag = 'internal scratch']
  %s0 = inlined_call_operand.vmem [shape: bf16[2,8,128], index: 0, kind: input, shape index: {}]
  %s1 = inlined_call_operand.vmem [shape: bf16[128,128], index: 1, kind: input, shape index: {}]
  %s2 = inlined_call_operand.vmem [shape: f32[1,128], index: 2, kind: input, shape index: {}]
  %s3 = inlined_call_operand.vmem [shape: bf16[128,128], index: 3, kind: input, shape index: {}]
  %s4 = inlined_call_operand.vmem [shape: bf16[128,128], index: 4, kind: input, shape index: {}]
  %s5 = inlined_call_operand.vmem [shape: bf16[128,128], index: 5, kind: input, shape index: {}]
  %s6 = inlined_call_operand.vmem [shape: bf16[128,128], index: 6, kind: input, shape index: {}]
  %s7 = inlined_call_operand.vmem [shape: bf16[128,128], index: 7, kind: input, shape index: {}]
  %s8 = inlined_call_operand.vmem [shape: f32[2,4,128], index: 8, kind: input, shape index: {}]
  %s9 = inlined_call_operand.hbm [shape: f32[2,4,128], index: 9, kind: output, shape index: {0}]
  %s10 = inlined_call_operand.vmem [shape: f32[2,1,128], index: 10, kind: output, shape index: {1}]
  %11 = xla_tuple %s9, %s10
  %s12 = sld [smem:[#allocation0]]
  $region77: #{encoder_forward.1} parent=0
    _
  %s14 = ssub.s32 1, %s12
  %s15 = scalar_select 0, %s14, %s12
  $region1: #{encoder_forward.1} parent=0
    #allocation2 [shape = 'u8[4096]{0}', space=vmem, size = 0x1000, scoped, tag = 'output window, operand 0']
    #allocation3 [shape = 's32[2]{0}', space=sflag, size = 0x8, scoped, tag = 'scoped memory for encoder_forward.1']
    %16 = vsyncpa [#allocation3], 0
    %s17 = scalar_lea.sflag [#allocation3], 1
    %18 = vsyncpa %s17, 0
    loop: start=0, step=1, limit=4
    $region2: #{encoder_forward.1} parent=1 // loop_pre_header
      _
    $region3: #{encoder_forward.1} parent=1 // loop_header
      %s20 = sphi 0, %s24
      %p21 = scmp.ge.s32.totalorder %s20, 4
      %s30 = sphi 0, %s32
      %s33 = sphi 0, %s30
      %s34 = sphi 0, %s33
      %s50 = sphi 0, %s34
      %s54 = sphi 0, %s54
      %s56 = sphi 0, %s54
      %s57 = sphi 0, %s56
      %s71 = sphi 0, %s57
      %s75 = sphi 0, %s75
      %s77 = sphi 0, %s75
      %s78 = sphi 0, %s77
      %s92 = sphi 0, %s78
      %s96 = sphi 0, %s96
      %s98 = sphi 0, %s96
      %s99 = sphi 0, %s98
      %s113 = sphi 0, %s99
      %s117 = sphi 0, %s117
      %s119 = sphi 0, %s117
      %s120 = sphi 0, %s119
      %s134 = sphi 0, %s120
      %s138 = sphi 0, %s138
      %s140 = sphi 0, %s138
      %s141 = sphi 0, %s140
      %s155 = sphi 0, %s141
      %s159 = sphi 0, %s159
      %s161 = sphi 0, %s159
      %s162 = sphi 0, %s161
      %s176 = sphi 0, %s162
      %s180 = sphi 0, %s180
      %s182 = sphi 0, %s180
      %s183 = sphi 0, %s182
      %s197 = sphi 0, %s183
      %s203 = sphi 0, %s205
      %s206 = sphi 0, %s203
      %s207 = sphi 0, %s206
      %s223 = sphi 0, %s207
      %s229 = sphi 0, %s231
      %s232 = sphi 0, %s229
      %s233 = sphi 0, %s232
      %s249 = sphi 0, %s233
      %s255 = sphi 0, %s257
      %s258 = sphi 0, %s255
      %s259 = sphi 0, %s258
      %s275 = sphi 0, %s259
    $region4: #{encoder_forward.1} parent=1 // loop_header_branch
      %23 = sbr.rel (%p21) target = $region8
    $region5: #{encoder_forward.1} parent=1 // loop_body
      %s25 = ssub.s32 %s20, 1
      %s26 = ssub.s32 %s20, 2
      %s27 = sadd.s32 %s20, 1
      %s28 = ssub.s32 %s20, %s27
      %p29 = scmp.eq.s32.totalorder %s28, 0
      %s31 = sadd.s32 %s30, 1
      %s32 = scalar_select %p29, %s30, %s31
      %p35 = pneg %p29
      %p36 = scmp.eq.s32.totalorder %s20, 1
      %p37 = por %p35, %p36
      %p38 = scmp.ne.s32.totalorder %s30, %s33
      %p39 = scmp.eq.s32.totalorder %s20, 0
      %p40 = por %p38, %p39
      %p41 = scmp.ne.s32.totalorder %s30, %s33
      %p42 = scmp.eq.s32.totalorder %s25, 1
      %p43 = por %p41, %p42
      %p44 = scmp.ne.s32.totalorder %s33, %s34
      %p45 = scmp.eq.s32.totalorder %s25, 0
      %p46 = por %p44, %p45
      %p47 = scmp.ne.s32.totalorder %s33, %s34
      %p48 = scmp.eq.s32.totalorder %s26, 1
      %p49 = por %p47, %p48
      %p51 = scmp.ne.s32.totalorder %s34, %s50
      %p52 = scmp.eq.s32.totalorder %s26, 0
      %p53 = por %p51, %p52
      %s55 = sadd.s32 %s54, 1
      %p58 = scmp.eq.s32.totalorder %s20, 1
      %p59 = scmp.ne.s32.totalorder %s54, %s56
      %p60 = scmp.eq.s32.totalorder %s20, 0
      %p61 = por %p59, %p60
      %p62 = scmp.ne.s32.totalorder %s54, %s56
      %p63 = scmp.eq.s32.totalorder %s25, 1
      %p64 = por %p62, %p63
      %p65 = scmp.ne.s32.totalorder %s56, %s57
      %p66 = scmp.eq.s32.totalorder %s25, 0
      %p67 = por %p65, %p66
      %p68 = scmp.ne.s32.totalorder %s56, %s57
      %p69 = scmp.eq.s32.totalorder %s26, 1
      %p70 = por %p68, %p69
      %p72 = scmp.ne.s32.totalorder %s57, %s71
      %p73 = scmp.eq.s32.totalorder %s26, 0
      %p74 = por %p72, %p73
      %s76 = sadd.s32 %s75, 1
      %p79 = scmp.eq.s32.totalorder %s20, 1
      %p80 = scmp.ne.s32.totalorder %s75, %s77
      %p81 = scmp.eq.s32.totalorder %s20, 0
      %p82 = por %p80, %p81
      %p83 = scmp.ne.s32.totalorder %s75, %s77
      %p84 = scmp.eq.s32.totalorder %s25, 1
      %p85 = por %p83, %p84
      %p86 = scmp.ne.s32.totalorder %s77, %s78
      %p87 = scmp.eq.s32.totalorder %s25, 0
      %p88 = por %p86, %p87
      %p89 = scmp.ne.s32.totalorder %s77, %s78
      %p90 = scmp.eq.s32.totalorder %s26, 1
      %p91 = por %p89, %p90
      %p93 = scmp.ne.s32.totalorder %s78, %s92
      %p94 = scmp.eq.s32.totalorder %s26, 0
      %p95 = por %p93, %p94
      %s97 = sadd.s32 %s96, 1
      %p100 = scmp.eq.s32.totalorder %s20, 1
      %p101 = scmp.ne.s32.totalorder %s96, %s98
      %p102 = scmp.eq.s32.totalorder %s20, 0
      %p103 = por %p101, %p102
      %p104 = scmp.ne.s32.totalorder %s96, %s98
      %p105 = scmp.eq.s32.totalorder %s25, 1
      %p106 = por %p104, %p105
      %p107 = scmp.ne.s32.totalorder %s98, %s99
      %p108 = scmp.eq.s32.totalorder %s25, 0
      %p109 = por %p107, %p108
      %p110 = scmp.ne.s32.totalorder %s98, %s99
      %p111 = scmp.eq.s32.totalorder %s26, 1
      %p112 = por %p110, %p111
      %p114 = scmp.ne.s32.totalorder %s99, %s113
      %p115 = scmp.eq.s32.totalorder %s26, 0
      %p116 = por %p114, %p115
      %s118 = sadd.s32 %s117, 1
      %p121 = scmp.eq.s32.totalorder %s20, 1
      %p122 = scmp.ne.s32.totalorder %s117, %s119
      %p123 = scmp.eq.s32.totalorder %s20, 0
      %p124 = por %p122, %p123
      %p125 = scmp.ne.s32.totalorder %s117, %s119
      %p126 = scmp.eq.s32.totalorder %s25, 1
      %p127 = por %p125, %p126
      %p128 = scmp.ne.s32.totalorder %s119, %s120
      %p129 = scmp.eq.s32.totalorder %s25, 0
      %p130 = por %p128, %p129
      %p131 = scmp.ne.s32.totalorder %s119, %s120
      %p132 = scmp.eq.s32.totalorder %s26, 1
      %p133 = por %p131, %p132
      %p135 = scmp.ne.s32.totalorder %s120, %s134
      %p136 = scmp.eq.s32.totalorder %s26, 0
      %p137 = por %p135, %p136
      %s139 = sadd.s32 %s138, 1
      %p142 = scmp.eq.s32.totalorder %s20, 1
      %p143 = scmp.ne.s32.totalorder %s138, %s140
      %p144 = scmp.eq.s32.totalorder %s20, 0
      %p145 = por %p143, %p144
      %p146 = scmp.ne.s32.totalorder %s138, %s140
      %p147 = scmp.eq.s32.totalorder %s25, 1
      %p148 = por %p146, %p147
      %p149 = scmp.ne.s32.totalorder %s140, %s141
      %p150 = scmp.eq.s32.totalorder %s25, 0
      %p151 = por %p149, %p150
      %p152 = scmp.ne.s32.totalorder %s140, %s141
      %p153 = scmp.eq.s32.totalorder %s26, 1
      %p154 = por %p152, %p153
      %p156 = scmp.ne.s32.totalorder %s141, %s155
      %p157 = scmp.eq.s32.totalorder %s26, 0
      %p158 = por %p156, %p157
      %s160 = sadd.s32 %s159, 1
      %p163 = scmp.eq.s32.totalorder %s20, 1
      %p164 = scmp.ne.s32.totalorder %s159, %s161
      %p165 = scmp.eq.s32.totalorder %s20, 0
      %p166 = por %p164, %p165
      %p167 = scmp.ne.s32.totalorder %s159, %s161
      %p168 = scmp.eq.s32.totalorder %s25, 1
      %p169 = por %p167, %p168
      %p170 = scmp.ne.s32.totalorder %s161, %s162
      %p171 = scmp.eq.s32.totalorder %s25, 0
      %p172 = por %p170, %p171
      %p173 = scmp.ne.s32.totalorder %s161, %s162
      %p174 = scmp.eq.s32.totalorder %s26, 1
      %p175 = por %p173, %p174
      %p177 = scmp.ne.s32.totalorder %s162, %s176
      %p178 = scmp.eq.s32.totalorder %s26, 0
      %p179 = por %p177, %p178
      %s181 = sadd.s32 %s180, 1
      %p184 = scmp.eq.s32.totalorder %s20, 1
      %p185 = scmp.ne.s32.totalorder %s180, %s182
      %p186 = scmp.eq.s32.totalorder %s20, 0
      %p187 = por %p185, %p186
      %p188 = scmp.ne.s32.totalorder %s180, %s182
      %p189 = scmp.eq.s32.totalorder %s25, 1
      %p190 = por %p188, %p189
      %p191 = scmp.ne.s32.totalorder %s182, %s183
      %p192 = scmp.eq.s32.totalorder %s25, 0
      %p193 = por %p191, %p192
      %p194 = scmp.ne.s32.totalorder %s182, %s183
      %p195 = scmp.eq.s32.totalorder %s26, 1
      %p196 = por %p194, %p195
      %p198 = scmp.ne.s32.totalorder %s183, %s197
      %p199 = scmp.eq.s32.totalorder %s26, 0
      %p200 = por %p198, %p199
      %s201 = ssub.s32 %s20, %s27
      %p202 = scmp.eq.s32.totalorder %s201, 0
      %s204 = sadd.s32 %s203, 1
      %s205 = scalar_select %p202, %s203, %s204
      %p208 = pneg %p202
      %p209 = scmp.eq.s32.totalorder %s20, 1
      %p210 = por %p208, %p209
      %p211 = scmp.ne.s32.totalorder %s203, %s206
      %p212 = scmp.eq.s32.totalorder %s20, 0
      %p213 = por %p211, %p212
      %p214 = scmp.ne.s32.totalorder %s203, %s206
      %p215 = scmp.eq.s32.totalorder %s25, 1
      %p216 = por %p214, %p215
      %p217 = scmp.ne.s32.totalorder %s206, %s207
      %p218 = scmp.eq.s32.totalorder %s25, 0
      %p219 = por %p217, %p218
      %p220 = scmp.ne.s32.totalorder %s206, %s207
      %p221 = scmp.eq.s32.totalorder %s26, 1
      %p222 = por %p220, %p221
      %p224 = scmp.ne.s32.totalorder %s207, %s223
      %p225 = scmp.eq.s32.totalorder %s26, 0
      %p226 = por %p224, %p225
      %s227 = ssub.s32 %s20, %s27
      %p228 = scmp.eq.s32.totalorder %s227, 0
      %s230 = sadd.s32 %s229, 1
      %s231 = scalar_select %p228, %s229, %s230
      %p234 = pneg %p228
      %p235 = scmp.eq.s32.totalorder %s20, 1
      %p236 = por %p234, %p235
      %p237 = scmp.ne.s32.totalorder %s229, %s232
      %p238 = scmp.eq.s32.totalorder %s20, 0
      %p239 = por %p237, %p238
      %p240 = scmp.ne.s32.totalorder %s229, %s232
      %p241 = scmp.eq.s32.totalorder %s25, 1
      %p242 = por %p240, %p241
      %p243 = scmp.ne.s32.totalorder %s232, %s233
      %p244 = scmp.eq.s32.totalorder %s25, 0
      %p245 = por %p243, %p244
      %p246 = scmp.ne.s32.totalorder %s232, %s233
      %p247 = scmp.eq.s32.totalorder %s26, 1
      %p248 = por %p246, %p247
      %p250 = scmp.ne.s32.totalorder %s233, %s249
      %p251 = scmp.eq.s32.totalorder %s26, 0
      %p252 = por %p250, %p251
      %s253 = ssub.s32 %s20, %s27
      %p254 = scmp.eq.s32.totalorder %s253, 0
      %s256 = sadd.s32 %s255, 1
      %s257 = scalar_select %p254, %s255, %s256
      %p260 = pneg %p254
      %p261 = scmp.eq.s32.totalorder %s20, 1
      %p262 = por %p260, %p261
      %p263 = scmp.ne.s32.totalorder %s255, %s258
      %p264 = scmp.eq.s32.totalorder %s20, 0
      %p265 = por %p263, %p264
      %p266 = scmp.ne.s32.totalorder %s255, %s258
      %p267 = scmp.eq.s32.totalorder %s25, 1
      %p268 = por %p266, %p267
      %p269 = scmp.ne.s32.totalorder %s258, %s259
      %p270 = scmp.eq.s32.totalorder %s25, 0
      %p271 = por %p269, %p270
      %p272 = scmp.ne.s32.totalorder %s258, %s259
      %p273 = scmp.eq.s32.totalorder %s26, 1
      %p274 = por %p272, %p273
      %p276 = scmp.ne.s32.totalorder %s259, %s275
      %p277 = scmp.eq.s32.totalorder %s26, 0
      %p278 = por %p276, %p277
      %p279 = scmp.le.s32.totalorder 1, %s20
      %p280 = scmp.lt.s32.totalorder %s20, 3
      %p281 = pnand %p279, %p280
      %p282 = pneg %p281
      // Predicated region
      $region9: #{encoder_forward.1} parent=5 // pred_check
        _
      $region10: #{encoder_forward.1} parent=5 // pred_check_branch
        %284 = sbr.rel (%p281) target = $region12
      $region11: #{encoder_forward.1} parent=5 // pred_region
        %s285 = ssub.s32 %s20, 1
        // Predicated region
        $region13: #{encoder_forward.1} parent=11 // pred_check
          %p286 = pneg %p67
        $region14: #{encoder_forward.1} parent=11 // pred_check_branch
          %288 = sbr.rel (%p286) target = $region16
        $region15: #{encoder_forward.1} parent=11 // pred_region
          _
        $region16: #{encoder_forward.1} parent=11 // pred_fallthru
          _
        // Predicated region
        $region17: #{encoder_forward.1} parent=11 // pred_check
          %p289 = pneg %p88
        $region18: #{encoder_forward.1} parent=11 // pred_check_branch
          %291 = sbr.rel (%p289) target = $region20
        $region19: #{encoder_forward.1} parent=11 // pred_region
          _
        $region20: #{encoder_forward.1} parent=11 // pred_fallthru
          _
        // Predicated region
        $region21: #{encoder_forward.1} parent=11 // pred_check
          %p292 = pneg %p109
        $region22: #{encoder_forward.1} parent=11 // pred_check_branch
          %294 = sbr.rel (%p292) target = $region24
        $region23: #{encoder_forward.1} parent=11 // pred_region
          _
        $region24: #{encoder_forward.1} parent=11 // pred_fallthru
          _
        // Predicated region
        $region25: #{encoder_forward.1} parent=11 // pred_check
          %p295 = pneg %p130
        $region26: #{encoder_forward.1} parent=11 // pred_check_branch
          %297 = sbr.rel (%p295) target = $region28
        $region27: #{encoder_forward.1} parent=11 // pred_region
          _
        $region28: #{encoder_forward.1} parent=11 // pred_fallthru
          _
        // Predicated region
        $region29: #{encoder_forward.1} parent=11 // pred_check
          %p298 = pneg %p151
        $region30: #{encoder_forward.1} parent=11 // pred_check_branch
          %300 = sbr.rel (%p298) target = $region32
        $region31: #{encoder_forward.1} parent=11 // pred_region
          _
        $region32: #{encoder_forward.1} parent=11 // pred_fallthru
          _
        // Predicated region
        $region33: #{encoder_forward.1} parent=11 // pred_check
          %p301 = pneg %p172
        $region34: #{encoder_forward.1} parent=11 // pred_check_branch
          %303 = sbr.rel (%p301) target = $region36
        $region35: #{encoder_forward.1} parent=11 // pred_region
          _
        $region36: #{encoder_forward.1} parent=11 // pred_fallthru
          _
        // Predicated region
        $region37: #{encoder_forward.1} parent=11 // pred_check
          %p304 = pneg %p193
        $region38: #{encoder_forward.1} parent=11 // pred_check_branch
          %306 = sbr.rel (%p304) target = $region40
        $region39: #{encoder_forward.1} parent=11 // pred_region
          _
        $region40: #{encoder_forward.1} parent=11 // pred_fallthru
          _
      $region12: #{encoder_forward.1} parent=5 // pred_fallthru
        _
      %p307 = scmp.lt.s32.totalorder %s20, 2
      // Predicated region
      $region41: #{encoder_forward.1} parent=5 // pred_check
        %p308 = pneg %p307
      $region42: #{encoder_forward.1} parent=5 // pred_check_branch
        %310 = sbr.rel (%p308) target = $region44
      $region43: #{encoder_forward.1} parent=5 // pred_region
        // Predicated region
        $region45: #{encoder_forward.1} parent=43 // pred_check
          %p311 = pneg %p40
        $region46: #{encoder_forward.1} parent=43 // pred_check_branch
          %313 = sbr.rel (%p311) target = $region48
        $region47: #{encoder_forward.1} parent=43 // pred_region
          %p314 = scmp.lt.s32.totalorder %s20, 1
          %s315 = scalar_select %p314, %s20, 1
          %s316 = smul.addr %s315, 4
          %s317 = scalar_lea.vmem %s0, %s316
        $region48: #{encoder_forward.1} parent=43 // pred_fallthru
          _
        // Predicated region
        $region49: #{encoder_forward.1} parent=43 // pred_check
          %p318 = pneg %p213
        $region50: #{encoder_forward.1} parent=43 // pred_check_branch
          %320 = sbr.rel (%p318) target = $region52
        $region51: #{encoder_forward.1} parent=43 // pred_region
          %p321 = scmp.lt.s32.totalorder %s20, 1
          %s322 = scalar_select %p321, %s20, 1
          %s323 = smul.addr %s322, 4
          %s324 = scalar_lea.vmem %s8, %s323
        $region52: #{encoder_forward.1} parent=43 // pred_fallthru
          _
      $region44: #{encoder_forward.1} parent=5 // pred_fallthru
        _
      %p325 = scmp.le.s32.totalorder 1, %s20
      %p326 = scmp.lt.s32.totalorder %s20, 3
      %p327 = pnand %p325, %p326
      %p328 = pneg %p327
      // Predicated region
      $region53: #{encoder_forward.1} parent=5 // pred_check
        _
      $region54: #{encoder_forward.1} parent=5 // pred_check_branch
        %330 = sbr.rel (%p327) target = $region56
      $region55: #{encoder_forward.1} parent=5 // pred_region
        %s331 = ssub.s32 %s20, 1
        %p332 = scmp.lt.s32.totalorder %s25, 1
        %s333 = scalar_select %p332, %s25, 1
        %s334 = smul.addr %s333, 4
        %s335 = scalar_lea.vmem %s0, %s334
        %p336 = pneg %p46
        %p337 = pneg %p43
        %p338 = pneg %p67
        %p339 = pneg %p64
        %p340 = pneg %p88
        %p341 = pneg %p85
        %p342 = pneg %p109
        %p343 = pneg %p106
        %p344 = pneg %p130
        %p345 = pneg %p127
        %p346 = pneg %p151
        %p347 = pneg %p148
        %p348 = pneg %p172
        %p349 = pneg %p169
        %p350 = pneg %p193
        %p351 = pneg %p190
        %p352 = scmp.lt.s32.totalorder %s25, 1
        %s353 = scalar_select %p352, %s25, 1
        %s354 = smul.addr %s353, 4
        %s355 = scalar_lea.vmem %s8, %s354
        %p356 = pneg %p219
        %p357 = pneg %p216
        %p358 = pneg %p245
        %p359 = pneg %p242
        %s360 = sand.u32 %s232, 1
        %s361 = scalar_lea.sflag [#allocation3], %s360
        %s362 = sand.u32 %s232, 1
        %s363 = smul.addr %s362, 4
        %s364 = scalar_lea.vmem [#allocation2], %s363
        %p365 = pneg %p271
        %p366 = pneg %p268
        %p367 = scmp.lt.s32.totalorder %s25, 1
        %s368 = scalar_select %p367, %s25, 1
        %s369 = scalar_lea.vmem %s10, %s368
        %p370 = scmp.lt.s32.totalorder %s25, 1
        %s371 = scalar_select %p370, %s25, 1
        %s372 = smul.addr %s371, 4
        %s373 = scalar_lea.vmem %s0, %s372
        %p374 = scmp.lt.s32.totalorder %s25, 1
        %s375 = scalar_select %p374, %s25, 1
        %s376 = smul.addr %s375, 4
        %s377 = scalar_lea.vmem %s8, %s376
        %p378 = scmp.lt.s32.totalorder %s25, 1
        %s379 = scalar_select %p378, %s25, 1
        %s380 = scalar_lea.vmem %s10, %s379
        %v382 = vld [vmem:[%s373] sm:$0xf]
        %v383 = vld [vmem:[%s1] sm:$0xf]
        %v384 = vld [vmem:[%s1 + $0x4] sm:$0xf]
        %v385 = vld [vmem:[%s1 + $0x8] sm:$0xf]
        %v386 = vld [vmem:[%s1 + $0xc] sm:$0xf]
        %v387 = vld [vmem:[%s1 + $0x10] sm:$0xf]
        %v388 = vld [vmem:[%s1 + $0x14] sm:$0xf]
        %v389 = vld [vmem:[%s1 + $0x18] sm:$0xf]
        %v390 = vld [vmem:[%s1 + $0x1c] sm:$0xf]
        %v391 = vld [vmem:[%s1 + $0x20] sm:$0xf]
        %v392 = vld [vmem:[%s1 + $0x24] sm:$0xf]
        %v393 = vld [vmem:[%s1 + $0x28] sm:$0xf]
        %v394 = vld [vmem:[%s1 + $0x2c] sm:$0xf]
        %v395 = vld [vmem:[%s1 + $0x30] sm:$0xf]
        %v396 = vld [vmem:[%s1 + $0x34] sm:$0xf]
        %v397 = vld [vmem:[%s1 + $0x38] sm:$0xf]
        %v398 = vld [vmem:[%s1 + $0x3c] sm:$0xf]
        %v399 = vld [vmem:[%s2] sm:$0x1]
        %v401 = vlaneseq
        %v402 = vshrl.u32 %v401, 7
        %v403 = vsub.s32 0, %v402
        %v404 = vrot.slane %v399, %v403
        %v422 = vunpack.c.l.b16 %v383
        %v423 = vunpack.c.l.b16 %v384
        %v424 = vunpack.c.l.b16 %v385
        %v425 = vunpack.c.l.b16 %v386
        %v426 = vunpack.c.l.b16 %v387
        %v427 = vunpack.c.l.b16 %v388
        %v428 = vunpack.c.l.b16 %v389
        %v429 = vunpack.c.l.b16 %v390
        %v430 = vunpack.c.l.b16 %v391
        %v431 = vunpack.c.l.b16 %v392
        %v432 = vunpack.c.l.b16 %v393
        %v433 = vunpack.c.l.b16 %v394
        %v434 = vunpack.c.l.b16 %v395
        %v435 = vunpack.c.l.b16 %v396
        %v436 = vunpack.c.l.b16 %v397
        %v437 = vunpack.c.l.b16 %v398
        %v438 = vpack.c.b16 %v423, %v422
        %v439 = vpack.c.b16 %v425, %v424
        %v440 = vpack.c.b16 %v427, %v426
        %v441 = vpack.c.b16 %v429, %v428
        %v442 = vpack.c.b16 %v431, %v430
        %v443 = vpack.c.b16 %v433, %v432
        %v444 = vpack.c.b16 %v435, %v434
        %v445 = vpack.c.b16 %v437, %v436
        %454 = vmatprep.subr.bf16.mxu0 0
        %455 = vmatpush1.bf16.msra.mxu0 %v445
        %456 = vmatprep.subr.bf16.mxu0 0
        %457 = vmatpush1.bf16.msra.mxu0 %v444
        %458 = vmatprep.subr.bf16.mxu0 0
        %459 = vmatpush1.bf16.msra.mxu0 %v443
        %460 = vmatprep.subr.bf16.mxu0 0
        %461 = vmatpush1.bf16.msra.mxu0 %v442
        %462 = vmatprep.subr.bf16.mxu0 0
        %463 = vmatpush1.bf16.msra.mxu0 %v441
        %464 = vmatprep.subr.bf16.mxu0 0
        %465 = vmatpush1.bf16.msra.mxu0 %v440
        %466 = vmatprep.subr.bf16.mxu0 0
        %467 = vmatpush1.bf16.msra.mxu0 %v439
        %468 = vmatprep.subr.bf16.mxu0 0
        %469 = vmatpush1.bf16.msra.mxu0 %v438
        %470 = vmatprep.subr.bf16.mxu0 0
        %471 = vmatpush2.bf16.msra.mxu0 0
        %472 = vmatprep.subr.bf16.mxu0 0
        %473 = vmatpush2.bf16.msra.mxu0 0
        %474 = vmatprep.subr.bf16.mxu0 0
        %475 = vmatpush2.bf16.msra.mxu0 0
        %476 = vmatprep.subr.bf16.mxu0 0
        %477 = vmatpush2.bf16.msra.mxu0 0
        %478 = vmatprep.subr.bf16.mxu0 0
        %479 = vmatpush2.bf16.msra.mxu0 0
        %480 = vmatprep.subr.bf16.mxu0 0
        %481 = vmatpush2.bf16.msra.mxu0 0
        %482 = vmatprep.subr.bf16.mxu0 0
        %483 = vmatpush2.bf16.msra.mxu0 0
        %484 = vmatprep.subr.bf16.mxu0 0
        %485 = vmatpush2.bf16.msra.mxu0 0
        %486 = vmatprep.mubr.bf16.mxu0 0
        %487 = vmatmul.mubr.bf16.gmra.mxu0 %v382
        %v488 = vpop.f32.mrf.mxu0
        %v489 = vadd.f32 %v404, %v488
        %v490 = vpop.f32.mrf.mxu0
        %v491 = vpop.f32.mrf.mxu0
        %v492 = vpop.f32.mrf.mxu0
        %493 = vdwg.mxu0
        %v494 = vpack.c.bf16 %v489, %v489
        %v495 = vld [vmem:[%s3] sm:$0xf]
        %v496 = vld [vmem:[%s3 + $0x4] sm:$0xf]
        %v497 = vld [vmem:[%s3 + $0x8] sm:$0xf]
        %v498 = vld [vmem:[%s3 + $0xc] sm:$0xf]
        %v499 = vld [vmem:[%s3 + $0x10] sm:$0xf]
        %v500 = vld [vmem:[%s3 + $0x14] sm:$0xf]
        %v501 = vld [vmem:[%s3 + $0x18] sm:$0xf]
        %v502 = vld [vmem:[%s3 + $0x1c] sm:$0xf]
        %v503 = vld [vmem:[%s3 + $0x20] sm:$0xf]
        %v504 = vld [vmem:[%s3 + $0x24] sm:$0xf]
        %v505 = vld [vmem:[%s3 + $0x28] sm:$0xf]
        %v506 = vld [vmem:[%s3 + $0x2c] sm:$0xf]
        %v507 = vld [vmem:[%s3 + $0x30] sm:$0xf]
        %v508 = vld [vmem:[%s3 + $0x34] sm:$0xf]
        %v509 = vld [vmem:[%s3 + $0x38] sm:$0xf]
        %v510 = vld [vmem:[%s3 + $0x3c] sm:$0xf]
        %v527 = vunpack.c.l.b16 %v495
        %v528 = vunpack.c.l.b16 %v496
        %v529 = vunpack.c.l.b16 %v497
        %v530 = vunpack.c.l.b16 %v498
        %v531 = vunpack.c.l.b16 %v499
        %v532 = vunpack.c.l.b16 %v500
        %v533 = vunpack.c.l.b16 %v501
        %v534 = vunpack.c.l.b16 %v502
        %v535 = vunpack.c.l.b16 %v503
        %v536 = vunpack.c.l.b16 %v504
        %v537 = vunpack.c.l.b16 %v505
        %v538 = vunpack.c.l.b16 %v506
        %v539 = vunpack.c.l.b16 %v507
        %v540 = vunpack.c.l.b16 %v508
        %v541 = vunpack.c.l.b16 %v509
        %v542 = vunpack.c.l.b16 %v510
        %v543 = vpack.c.b16 %v528, %v527
        %v544 = vpack.c.b16 %v530, %v529
        %v545 = vpack.c.b16 %v532, %v531
        %v546 = vpack.c.b16 %v534, %v533
        %v547 = vpack.c.b16 %v536, %v535
        %v548 = vpack.c.b16 %v538, %v537
        %v549 = vpack.c.b16 %v540, %v539
        %v550 = vpack.c.b16 %v542, %v541
        %559 = vmatprep.subr.bf16.mxu0 0
        %560 = vmatpush1.bf16.msra.mxu0 %v550
        %561 = vmatprep.subr.bf16.mxu0 0
        %562 = vmatpush1.bf16.msra.mxu0 %v549
        %563 = vmatprep.subr.bf16.mxu0 0
        %564 = vmatpush1.bf16.msra.mxu0 %v548
        %565 = vmatprep.subr.bf16.mxu0 0
        %566 = vmatpush1.bf16.msra.mxu0 %v547
        %567 = vmatprep.subr.bf16.mxu0 0
        %568 = vmatpush1.bf16.msra.mxu0 %v546
        %569 = vmatprep.subr.bf16.mxu0 0
        %570 = vmatpush1.bf16.msra.mxu0 %v545
        %571 = vmatprep.subr.bf16.mxu0 0
        %572 = vmatpush1.bf16.msra.mxu0 %v544
        %573 = vmatprep.subr.bf16.mxu0 0
        %574 = vmatpush1.bf16.msra.mxu0 %v543
        %575 = vmatprep.subr.bf16.mxu0 0
        %576 = vmatpush2.bf16.msra.mxu0 0
        %577 = vmatprep.subr.bf16.mxu0 0
        %578 = vmatpush2.bf16.msra.mxu0 0
        %579 = vmatprep.subr.bf16.mxu0 0
        %580 = vmatpush2.bf16.msra.mxu0 0
        %581 = vmatprep.subr.bf16.mxu0 0
        %582 = vmatpush2.bf16.msra.mxu0 0
        %583 = vmatprep.subr.bf16.mxu0 0
        %584 = vmatpush2.bf16.msra.mxu0 0
        %585 = vmatprep.subr.bf16.mxu0 0
        %586 = vmatpush2.bf16.msra.mxu0 0
        %587 = vmatprep.subr.bf16.mxu0 0
        %588 = vmatpush2.bf16.msra.mxu0 0
        %589 = vmatprep.subr.bf16.mxu0 0
        %590 = vmatpush2.bf16.msra.mxu0 0
        %591 = vmatprep.mubr.bf16.mxu0 0
        %592 = vmatmul.mubr.bf16.gmra.mxu0 %v494
        %v593 = vpop.f32.mrf.mxu0
        %v594 = vadd.f32 0.0, %v593
        %v595 = vpop.f32.mrf.mxu0
        %v596 = vpop.f32.mrf.mxu0
        %v597 = vpop.f32.mrf.mxu0
        %598 = vdwg.mxu0
        %v599 = vld [vmem:[%s4] sm:$0xf]
        %v600 = vld [vmem:[%s4 + $0x4] sm:$0xf]
        %v601 = vld [vmem:[%s4 + $0x8] sm:$0xf]
        %v602 = vld [vmem:[%s4 + $0xc] sm:$0xf]
        %v603 = vld [vmem:[%s4 + $0x10] sm:$0xf]
        %v604 = vld [vmem:[%s4 + $0x14] sm:$0xf]
        %v605 = vld [vmem:[%s4 + $0x18] sm:$0xf]
        %v606 = vld [vmem:[%s4 + $0x1c] sm:$0xf]
        %v607 = vld [vmem:[%s4 + $0x20] sm:$0xf]
        %v608 = vld [vmem:[%s4 + $0x24] sm:$0xf]
        %v609 = vld [vmem:[%s4 + $0x28] sm:$0xf]
        %v610 = vld [vmem:[%s4 + $0x2c] sm:$0xf]
        %v611 = vld [vmem:[%s4 + $0x30] sm:$0xf]
        %v612 = vld [vmem:[%s4 + $0x34] sm:$0xf]
        %v613 = vld [vmem:[%s4 + $0x38] sm:$0xf]
        %v614 = vld [vmem:[%s4 + $0x3c] sm:$0xf]
        %v631 = vunpack.c.l.b16 %v599
        %v632 = vunpack.c.l.b16 %v600
        %v633 = vunpack.c.l.b16 %v601
        %v634 = vunpack.c.l.b16 %v602
        %v635 = vunpack.c.l.b16 %v603
        %v636 = vunpack.c.l.b16 %v604
        %v637 = vunpack.c.l.b16 %v605
        %v638 = vunpack.c.l.b16 %v606
        %v639 = vunpack.c.l.b16 %v607
        %v640 = vunpack.c.l.b16 %v608
        %v641 = vunpack.c.l.b16 %v609
        %v642 = vunpack.c.l.b16 %v610
        %v643 = vunpack.c.l.b16 %v611
        %v644 = vunpack.c.l.b16 %v612
        %v645 = vunpack.c.l.b16 %v613
        %v646 = vunpack.c.l.b16 %v614
        %v647 = vpack.c.b16 %v632, %v631
        %v648 = vpack.c.b16 %v634, %v633
        %v649 = vpack.c.b16 %v636, %v635
        %v650 = vpack.c.b16 %v638, %v637
        %v651 = vpack.c.b16 %v640, %v639
        %v652 = vpack.c.b16 %v642, %v641
        %v653 = vpack.c.b16 %v644, %v643
        %v654 = vpack.c.b16 %v646, %v645
        %663 = vmatprep.subr.bf16.mxu0 0
        %664 = vmatpush1.bf16.msra.mxu0 %v654
        %665 = vmatprep.subr.bf16.mxu0 0
        %666 = vmatpush1.bf16.msra.mxu0 %v653
        %667 = vmatprep.subr.bf16.mxu0 0
        %668 = vmatpush1.bf16.msra.mxu0 %v652
        %669 = vmatprep.subr.bf16.mxu0 0
        %670 = vmatpush1.bf16.msra.mxu0 %v651
        %671 = vmatprep.subr.bf16.mxu0 0
        %672 = vmatpush1.bf16.msra.mxu0 %v650
        %673 = vmatprep.subr.bf16.mxu0 0
        %674 = vmatpush1.bf16.msra.mxu0 %v649
        %675 = vmatprep.subr.bf16.mxu0 0
        %676 = vmatpush1.bf16.msra.mxu0 %v648
        %677 = vmatprep.subr.bf16.mxu0 0
        %678 = vmatpush1.bf16.msra.mxu0 %v647
        %679 = vmatprep.subr.bf16.mxu0 0
        %680 = vmatpush2.bf16.msra.mxu0 0
        %681 = vmatprep.subr.bf16.mxu0 0
        %682 = vmatpush2.bf16.msra.mxu0 0
        %683 = vmatprep.subr.bf16.mxu0 0
        %684 = vmatpush2.bf16.msra.mxu0 0
        %685 = vmatprep.subr.bf16.mxu0 0
        %686 = vmatpush2.bf16.msra.mxu0 0
        %687 = vmatprep.subr.bf16.mxu0 0
        %688 = vmatpush2.bf16.msra.mxu0 0
        %689 = vmatprep.subr.bf16.mxu0 0
        %690 = vmatpush2.bf16.msra.mxu0 0
        %691 = vmatprep.subr.bf16.mxu0 0
        %692 = vmatpush2.bf16.msra.mxu0 0
        %693 = vmatprep.subr.bf16.mxu0 0
        %694 = vmatpush2.bf16.msra.mxu0 0
        %695 = vmatprep.mubr.bf16.mxu0 0
        %696 = vmatmul.mubr.bf16.gmra.mxu0 %v494
        %v697 = vpop.f32.mrf.mxu0
        %v698 = vadd.f32 0.0, %v697
        %v699 = vpop.f32.mrf.mxu0
        %v700 = vpop.f32.mrf.mxu0
        %v701 = vpop.f32.mrf.mxu0
        %702 = vdwg.mxu0
        %v704 = vcombine.high %v594, %v594
        %v706 = vunpack.c.l.s4 1966171168
        %v707 = vunpack.c.0.s8 %v706
        %v708 = vlaneseq
        %v709 = vshrl.u32 %v708, 7
        %v710 = vsub.s32 %v707, %v709
        %v711 = vrot.slane %v594, %v710
        %v713 = vunpack.c.l.s4 1966171168
        %v714 = vunpack.c.0.s8 %v713
        %v715 = vlaneseq
        %v716 = vshrl.u32 %v715, 7
        %v717 = vsub.s32 %v714, %v716
        %v718 = vrot.slane %v704, %v717
        %v719 = vcombine.high %v711, %v711
        %v720 = vcombine.high %v718, %v718
        %v722 = vunpack.c.l.s4 1966171168
        %v723 = vunpack.c.0.s8 %v722
        %v724 = vlaneseq
        %v725 = vshrl.u32 %v724, 7
        %v726 = vsub.s32 %v723, %v725
        %v727 = vrot.slane %v711, %v726
        %v729 = vunpack.c.l.s4 1966171168
        %v730 = vunpack.c.0.s8 %v729
        %v731 = vlaneseq
        %v732 = vshrl.u32 %v731, 7
        %v733 = vsub.s32 %v730, %v732
        %v734 = vrot.slane %v718, %v733
        %v736 = vunpack.c.l.s4 1966171168
        %v737 = vunpack.c.0.s8 %v736
        %v738 = vlaneseq
        %v739 = vshrl.u32 %v738, 7
        %v740 = vsub.s32 %v737, %v739
        %v741 = vrot.slane %v719, %v740
        %v743 = vunpack.c.l.s4 1966171168
        %v744 = vunpack.c.0.s8 %v743
        %v745 = vlaneseq
        %v746 = vshrl.u32 %v745, 7
        %v747 = vsub.s32 %v744, %v746
        %v748 = vrot.slane %v720, %v747
        %v749 = vcombine.high %v727, %v727
        %v750 = vcombine.high %v734, %v734
        %v751 = vcombine.high %v741, %v741
        %v752 = vcombine.high %v748, %v748
        %v753 = vlaneseq
        %v754 = vshrl.u32 %v753, 7
        %v755 = vsub.s32 0, %v754
        %v756 = vrot.slane %v727, %v755
        %v757 = vlaneseq
        %v758 = vshrl.u32 %v757, 7
        %v759 = vsub.s32 0, %v758
        %v760 = vrot.slane %v741, %v759
        %v761 = vlaneseq
        %v762 = vshrl.u32 %v761, 7
        %v763 = vsub.s32 0, %v762
        %v764 = vrot.slane %v749, %v763
        %v765 = vlaneseq
        %v766 = vshrl.u32 %v765, 7
        %v767 = vsub.s32 0, %v766
        %v768 = vrot.slane %v751, %v767
        %v769 = vlaneseq
        %v770 = vshrl.u32 %v769, 7
        %v771 = vsub.s32 0, %v770
        %v772 = vrot.slane %v734, %v771
        %v773 = vlaneseq
        %v774 = vshrl.u32 %v773, 7
        %v775 = vsub.s32 0, %v774
        %v776 = vrot.slane %v748, %v775
        %v777 = vlaneseq
        %v778 = vshrl.u32 %v777, 7
        %v779 = vsub.s32 0, %v778
        %v780 = vrot.slane %v750, %v779
        %v781 = vlaneseq
        %v782 = vshrl.u32 %v781, 7
        %v783 = vsub.s32 0, %v782
        %v784 = vrot.slane %v752, %v783
        %v793 = vadd.f32 %v756, %v698
        %v794 = vadd.f32 %v760, %v698
        %v795 = vadd.f32 %v764, %v698
        %v796 = vadd.f32 %v768, %v698
        %v797 = vadd.f32 %v772, %v698
        %v798 = vadd.f32 %v776, %v698
        %v799 = vadd.f32 %v780, %v698
        %v800 = vadd.f32 %v784, %v698
        %v801 = vmax.f32 %v793, 0.0
        %v802 = vmax.f32 %v794, 0.0
        %v803 = vmax.f32 %v795, 0.0
        %v804 = vmax.f32 %v796, 0.0
        %v805 = vmax.f32 %v797, 0.0
        %v806 = vmax.f32 %v798, 0.0
        %v807 = vmax.f32 %v799, 0.0
        %v808 = vmax.f32 %v800, 0.0
        %v809 = vpack.c.bf16 %v802, %v801
        %v810 = vpack.c.bf16 %v804, %v803
        %v811 = vpack.c.bf16 %v806, %v805
        %v812 = vpack.c.bf16 %v808, %v807
        %v813 = vld [vmem:[%s5] sm:$0xf]
        %v814 = vld [vmem:[%s5 + $0x4] sm:$0xf]
        %v815 = vld [vmem:[%s5 + $0x8] sm:$0xf]
        %v816 = vld [vmem:[%s5 + $0xc] sm:$0xf]
        %v817 = vld [vmem:[%s5 + $0x10] sm:$0xf]
        %v818 = vld [vmem:[%s5 + $0x14] sm:$0xf]
        %v819 = vld [vmem:[%s5 + $0x18] sm:$0xf]
        %v820 = vld [vmem:[%s5 + $0x1c] sm:$0xf]
        %v821 = vld [vmem:[%s5 + $0x20] sm:$0xf]
        %v822 = vld [vmem:[%s5 + $0x24] sm:$0xf]
        %v823 = vld [vmem:[%s5 + $0x28] sm:$0xf]
        %v824 = vld [vmem:[%s5 + $0x2c] sm:$0xf]
        %v825 = vld [vmem:[%s5 + $0x30] sm:$0xf]
        %v826 = vld [vmem:[%s5 + $0x34] sm:$0xf]
        %v827 = vld [vmem:[%s5 + $0x38] sm:$0xf]
        %v828 = vld [vmem:[%s5 + $0x3c] sm:$0xf]
        %v845 = vunpack.c.l.b16 %v813
        %v846 = vunpack.c.l.b16 %v814
        %v847 = vunpack.c.l.b16 %v815
        %v848 = vunpack.c.l.b16 %v816
        %v849 = vunpack.c.l.b16 %v817
        %v850 = vunpack.c.l.b16 %v818
        %v851 = vunpack.c.l.b16 %v819
        %v852 = vunpack.c.l.b16 %v820
        %v853 = vunpack.c.l.b16 %v821
        %v854 = vunpack.c.l.b16 %v822
        %v855 = vunpack.c.l.b16 %v823
        %v856 = vunpack.c.l.b16 %v824
        %v857 = vunpack.c.l.b16 %v825
        %v858 = vunpack.c.l.b16 %v826
        %v859 = vunpack.c.l.b16 %v827
        %v860 = vunpack.c.l.b16 %v828
        %v861 = vpack.c.b16 %v846, %v845
        %v862 = vpack.c.b16 %v848, %v847
        %v863 = vpack.c.b16 %v850, %v849
        %v864 = vpack.c.b16 %v852, %v851
        %v865 = vpack.c.b16 %v854, %v853
        %v866 = vpack.c.b16 %v856, %v855
        %v867 = vpack.c.b16 %v858, %v857
        %v868 = vpack.c.b16 %v860, %v859
        %877 = vmatprep.subr.bf16.mxu0 0
        %878 = vmatpush1.bf16.msra.mxu0 %v868
        %879 = vmatprep.subr.bf16.mxu0 0
        %880 = vmatpush1.bf16.msra.mxu0 %v867
        %881 = vmatprep.subr.bf16.mxu0 0
        %882 = vmatpush1.bf16.msra.mxu0 %v866
        %883 = vmatprep.subr.bf16.mxu0 0
        %884 = vmatpush1.bf16.msra.mxu0 %v865
        %885 = vmatprep.subr.bf16.mxu0 0
        %886 = vmatpush1.bf16.msra.mxu0 %v864
        %887 = vmatprep.subr.bf16.mxu0 0
        %888 = vmatpush1.bf16.msra.mxu0 %v863
        %889 = vmatprep.subr.bf16.mxu0 0
        %890 = vmatpush1.bf16.msra.mxu0 %v862
        %891 = vmatprep.subr.bf16.mxu0 0
        %892 = vmatpush1.bf16.msra.mxu0 %v861
        %893 = vmatprep.subr.bf16.mxu0 0
        %894 = vmatpush2.bf16.msra.mxu0 0
        %895 = vmatprep.subr.bf16.mxu0 0
        %896 = vmatpush2.bf16.msra.mxu0 0
        %897 = vmatprep.subr.bf16.mxu0 0
        %898 = vmatpush2.bf16.msra.mxu0 0
        %899 = vmatprep.subr.bf16.mxu0 0
        %900 = vmatpush2.bf16.msra.mxu0 0
        %901 = vmatprep.subr.bf16.mxu0 0
        %902 = vmatpush2.bf16.msra.mxu0 0
        %903 = vmatprep.subr.bf16.mxu0 0
        %904 = vmatpush2.bf16.msra.mxu0 0
        %905 = vmatprep.subr.bf16.mxu0 0
        %906 = vmatpush2.bf16.msra.mxu0 0
        %907 = vmatprep.subr.bf16.mxu0 0
        %908 = vmatpush2.bf16.msra.mxu0 0
        %909 = vmatprep.mubr.bf16.mxu0 0
        %910 = vmatmul.mubr.bf16.gmra.mxu0 %v809
        %v911 = vpop.f32.mrf.mxu0
        %v912 = vadd.f32 0.0, %v911
        %v913 = vpop.f32.mrf.mxu0
        %v914 = vpop.f32.mrf.mxu0
        %v915 = vadd.f32 0.0, %v914
        %v916 = vpop.f32.mrf.mxu0
        %917 = vmatprep.mubr.bf16.mxu0 0
        %918 = vmatmul.mubr.bf16.gmra.mxu0 %v810
        %v919 = vpop.f32.mrf.mxu0
        %v920 = vadd.f32 0.0, %v919
        %v921 = vpop.f32.mrf.mxu0
        %v922 = vpop.f32.mrf.mxu0
        %v923 = vadd.f32 0.0, %v922
        %v924 = vpop.f32.mrf.mxu0
        %925 = vmatprep.mubr.bf16.mxu0 0
        %926 = vmatmul.mubr.bf16.gmra.mxu0 %v811
        %v927 = vpop.f32.mrf.mxu0
        %v928 = vadd.f32 0.0, %v927
        %v929 = vpop.f32.mrf.mxu0
        %v930 = vpop.f32.mrf.mxu0
        %v931 = vadd.f32 0.0, %v930
        %v932 = vpop.f32.mrf.mxu0
        %933 = vmatprep.mubr.bf16.mxu0 0
        %934 = vmatmul.mubr.bf16.gmra.mxu0 %v812
        %v935 = vpop.f32.mrf.mxu0
        %v936 = vadd.f32 0.0, %v935
        %v937 = vpop.f32.mrf.mxu0
        %v938 = vpop.f32.mrf.mxu0
        %v939 = vadd.f32 0.0, %v938
        %v940 = vpop.f32.mrf.mxu0
        %941 = vdwg.mxu0
        %v942 = vmax.f32 %v912, 0.0
        %v943 = vmax.f32 %v915, 0.0
        %v944 = vmax.f32 %v920, 0.0
        %v945 = vmax.f32 %v923, 0.0
        %v946 = vmax.f32 %v928, 0.0
        %v947 = vmax.f32 %v931, 0.0
        %v948 = vmax.f32 %v936, 0.0
        %v949 = vmax.f32 %v939, 0.0
        %v950 = vpack.c.bf16 %v943, %v942
        %v951 = vpack.c.bf16 %v945, %v944
        %v952 = vpack.c.bf16 %v947, %v946
        %v953 = vpack.c.bf16 %v949, %v948
        %v954 = vld [vmem:[%s6] sm:$0xf]
        %v955 = vld [vmem:[%s6 + $0x4] sm:$0xf]
        %v956 = vld [vmem:[%s6 + $0x8] sm:$0xf]
        %v957 = vld [vmem:[%s6 + $0xc] sm:$0xf]
        %v958 = vld [vmem:[%s6 + $0x10] sm:$0xf]
        %v959 = vld [vmem:[%s6 + $0x14] sm:$0xf]
        %v960 = vld [vmem:[%s6 + $0x18] sm:$0xf]
        %v961 = vld [vmem:[%s6 + $0x1c] sm:$0xf]
        %v962 = vld [vmem:[%s6 + $0x20] sm:$0xf]
        %v963 = vld [vmem:[%s6 + $0x24] sm:$0xf]
        %v964 = vld [vmem:[%s6 + $0x28] sm:$0xf]
        %v965 = vld [vmem:[%s6 + $0x2c] sm:$0xf]
        %v966 = vld [vmem:[%s6 + $0x30] sm:$0xf]
        %v967 = vld [vmem:[%s6 + $0x34] sm:$0xf]
        %v968 = vld [vmem:[%s6 + $0x38] sm:$0xf]
        %v969 = vld [vmem:[%s6 + $0x3c] sm:$0xf]
        %v986 = vunpack.c.l.b16 %v954
        %v987 = vunpack.c.l.b16 %v955
        %v988 = vunpack.c.l.b16 %v956
        %v989 = vunpack.c.l.b16 %v957
        %v990 = vunpack.c.l.b16 %v958
        %v991 = vunpack.c.l.b16 %v959
        %v992 = vunpack.c.l.b16 %v960
        %v993 = vunpack.c.l.b16 %v961
        %v994 = vunpack.c.l.b16 %v962
        %v995 = vunpack.c.l.b16 %v963
        %v996 = vunpack.c.l.b16 %v964
        %v997 = vunpack.c.l.b16 %v965
        %v998 = vunpack.c.l.b16 %v966
        %v999 = vunpack.c.l.b16 %v967
        %v1000 = vunpack.c.l.b16 %v968
        %v1001 = vunpack.c.l.b16 %v969
        %v1002 = vpack.c.b16 %v987, %v986
        %v1003 = vpack.c.b16 %v989, %v988
        %v1004 = vpack.c.b16 %v991, %v990
        %v1005 = vpack.c.b16 %v993, %v992
        %v1006 = vpack.c.b16 %v995, %v994
        %v1007 = vpack.c.b16 %v997, %v996
        %v1008 = vpack.c.b16 %v999, %v998
        %v1009 = vpack.c.b16 %v1001, %v1000
        %1018 = vmatprep.subr.bf16.mxu0 0
        %1019 = vmatpush1.bf16.msra.mxu0 %v1009
        %1020 = vmatprep.subr.bf16.mxu0 0
        %1021 = vmatpush1.bf16.msra.mxu0 %v1008
        %1022 = vmatprep.subr.bf16.mxu0 0
        %1023 = vmatpush1.bf16.msra.mxu0 %v1007
        %1024 = vmatprep.subr.bf16.mxu0 0
        %1025 = vmatpush1.bf16.msra.mxu0 %v1006
        %1026 = vmatprep.subr.bf16.mxu0 0
        %1027 = vmatpush1.bf16.msra.mxu0 %v1005
        %1028 = vmatprep.subr.bf16.mxu0 0
        %1029 = vmatpush1.bf16.msra.mxu0 %v1004
        %1030 = vmatprep.subr.bf16.mxu0 0
        %1031 = vmatpush1.bf16.msra.mxu0 %v1003
        %1032 = vmatprep.subr.bf16.mxu0 0
        %1033 = vmatpush1.bf16.msra.mxu0 %v1002
        %1034 = vmatprep.subr.bf16.mxu0 0
        %1035 = vmatpush2.bf16.msra.mxu0 0
        %1036 = vmatprep.subr.bf16.mxu0 0
        %1037 = vmatpush2.bf16.msra.mxu0 0
        %1038 = vmatprep.subr.bf16.mxu0 0
        %1039 = vmatpush2.bf16.msra.mxu0 0
        %1040 = vmatprep.subr.bf16.mxu0 0
        %1041 = vmatpush2.bf16.msra.mxu0 0
        %1042 = vmatprep.subr.bf16.mxu0 0
        %1043 = vmatpush2.bf16.msra.mxu0 0
        %1044 = vmatprep.subr.bf16.mxu0 0
        %1045 = vmatpush2.bf16.msra.mxu0 0
        %1046 = vmatprep.subr.bf16.mxu0 0
        %1047 = vmatpush2.bf16.msra.mxu0 0
        %1048 = vmatprep.subr.bf16.mxu0 0
        %1049 = vmatpush2.bf16.msra.mxu0 0
        %1050 = vmatprep.mubr.bf16.mxu0 0
        %1051 = vmatmul.mubr.bf16.gmra.mxu0 %v950
        %v1052 = vpop.f32.mrf.mxu0
        %v1053 = vadd.f32 0.0, %v1052
        %v1054 = vpop.f32.mrf.mxu0
        %v1055 = vpop.f32.mrf.mxu0
        %v1056 = vadd.f32 0.0, %v1055
        %v1057 = vpop.f32.mrf.mxu0
        %1058 = vmatprep.mubr.bf16.mxu0 0
        %1059 = vmatmul.mubr.bf16.gmra.mxu0 %v951
        %v1060 = vpop.f32.mrf.mxu0
        %v1061 = vadd.f32 0.0, %v1060
        %v1062 = vpop.f32.mrf.mxu0
        %v1063 = vpop.f32.mrf.mxu0
        %v1064 = vadd.f32 0.0, %v1063
        %v1065 = vpop.f32.mrf.mxu0
        %1066 = vmatprep.mubr.bf16.mxu0 0
        %1067 = vmatmul.mubr.bf16.gmra.mxu0 %v952
        %v1068 = vpop.f32.mrf.mxu0
        %v1069 = vadd.f32 0.0, %v1068
        %v1070 = vpop.f32.mrf.mxu0
        %v1071 = vpop.f32.mrf.mxu0
        %v1072 = vadd.f32 0.0, %v1071
        %v1073 = vpop.f32.mrf.mxu0
        %1074 = vmatprep.mubr.bf16.mxu0 0
        %1075 = vmatmul.mubr.bf16.gmra.mxu0 %v953
        %v1076 = vpop.f32.mrf.mxu0
        %v1077 = vadd.f32 0.0, %v1076
        %v1078 = vpop.f32.mrf.mxu0
        %v1079 = vpop.f32.mrf.mxu0
        %v1080 = vadd.f32 0.0, %v1079
        %v1081 = vpop.f32.mrf.mxu0
        %1082 = vdwg.mxu0
        %v1083 = vmax.f32 %v1053, 0.0
        %v1084 = vmax.f32 %v1056, 0.0
        %v1085 = vmax.f32 %v1061, 0.0
        %v1086 = vmax.f32 %v1064, 0.0
        %v1087 = vmax.f32 %v1069, 0.0
        %v1088 = vmax.f32 %v1072, 0.0
        %v1089 = vmax.f32 %v1077, 0.0
        %v1090 = vmax.f32 %v1080, 0.0
        %v1091 = vld [vmem:[%s7] sm:$0xf]
        %v1092 = vld [vmem:[%s7 + $0x4] sm:$0xf]
        %v1093 = vld [vmem:[%s7 + $0x8] sm:$0xf]
        %v1094 = vld [vmem:[%s7 + $0xc] sm:$0xf]
        %v1095 = vld [vmem:[%s7 + $0x10] sm:$0xf]
        %v1096 = vld [vmem:[%s7 + $0x14] sm:$0xf]
        %v1097 = vld [vmem:[%s7 + $0x18] sm:$0xf]
        %v1098 = vld [vmem:[%s7 + $0x1c] sm:$0xf]
        %v1099 = vld [vmem:[%s7 + $0x20] sm:$0xf]
        %v1100 = vld [vmem:[%s7 + $0x24] sm:$0xf]
        %v1101 = vld [vmem:[%s7 + $0x28] sm:$0xf]
        %v1102 = vld [vmem:[%s7 + $0x2c] sm:$0xf]
        %v1103 = vld [vmem:[%s7 + $0x30] sm:$0xf]
        %v1104 = vld [vmem:[%s7 + $0x34] sm:$0xf]
        %v1105 = vld [vmem:[%s7 + $0x38] sm:$0xf]
        %v1106 = vld [vmem:[%s7 + $0x3c] sm:$0xf]
        %v1123 = vunpack.c.l.b16 %v1091
        %v1124 = vunpack.c.l.b16 %v1092
        %v1125 = vunpack.c.l.b16 %v1093
        %v1126 = vunpack.c.l.b16 %v1094
        %v1127 = vunpack.c.l.b16 %v1095
        %v1128 = vunpack.c.l.b16 %v1096
        %v1129 = vunpack.c.l.b16 %v1097
        %v1130 = vunpack.c.l.b16 %v1098
        %v1131 = vunpack.c.l.b16 %v1099
        %v1132 = vunpack.c.l.b16 %v1100
        %v1133 = vunpack.c.l.b16 %v1101
        %v1134 = vunpack.c.l.b16 %v1102
        %v1135 = vunpack.c.l.b16 %v1103
        %v1136 = vunpack.c.l.b16 %v1104
        %v1137 = vunpack.c.l.b16 %v1105
        %v1138 = vunpack.c.l.b16 %v1106
        %v1139 = vpack.c.b16 %v1124, %v1123
        %v1140 = vpack.c.b16 %v1126, %v1125
        %v1141 = vpack.c.b16 %v1128, %v1127
        %v1142 = vpack.c.b16 %v1130, %v1129
        %v1143 = vpack.c.b16 %v1132, %v1131
        %v1144 = vpack.c.b16 %v1134, %v1133
        %v1145 = vpack.c.b16 %v1136, %v1135
        %v1146 = vpack.c.b16 %v1138, %v1137
        %1155 = vmatprep.subr.bf16.mxu0 0
        %1156 = vmatpush1.bf16.msra.mxu0 %v1146
        %1157 = vmatprep.subr.bf16.mxu0 0
        %1158 = vmatpush1.bf16.msra.mxu0 %v1145
        %1159 = vmatprep.subr.bf16.mxu0 0
        %1160 = vmatpush1.bf16.msra.mxu0 %v1144
        %1161 = vmatprep.subr.bf16.mxu0 0
        %1162 = vmatpush1.bf16.msra.mxu0 %v1143
        %1163 = vmatprep.subr.bf16.mxu0 0
        %1164 = vmatpush1.bf16.msra.mxu0 %v1142
        %1165 = vmatprep.subr.bf16.mxu0 0
        %1166 = vmatpush1.bf16.msra.mxu0 %v1141
        %1167 = vmatprep.subr.bf16.mxu0 0
        %1168 = vmatpush1.bf16.msra.mxu0 %v1140
        %1169 = vmatprep.subr.bf16.mxu0 0
        %1170 = vmatpush1.bf16.msra.mxu0 %v1139
        %1171 = vmatprep.subr.bf16.mxu0 0
        %1172 = vmatpush2.bf16.msra.mxu0 0
        %1173 = vmatprep.subr.bf16.mxu0 0
        %1174 = vmatpush2.bf16.msra.mxu0 0
        %1175 = vmatprep.subr.bf16.mxu0 0
        %1176 = vmatpush2.bf16.msra.mxu0 0
        %1177 = vmatprep.subr.bf16.mxu0 0
        %1178 = vmatpush2.bf16.msra.mxu0 0
        %1179 = vmatprep.subr.bf16.mxu0 0
        %1180 = vmatpush2.bf16.msra.mxu0 0
        %1181 = vmatprep.subr.bf16.mxu0 0
        %1182 = vmatpush2.bf16.msra.mxu0 0
        %1183 = vmatprep.subr.bf16.mxu0 0
        %1184 = vmatpush2.bf16.msra.mxu0 0
        %1185 = vmatprep.subr.bf16.mxu0 0
        %1186 = vmatpush2.bf16.msra.mxu0 0
        %1187 = vmatprep.mubr.bf16.mxu0 0
        %1188 = vmatmul.mubr.bf16.gmra.mxu0 %v950
        %v1189 = vpop.f32.mrf.mxu0
        %v1190 = vadd.f32 0.0, %v1189
        %v1191 = vpop.f32.mrf.mxu0
        %v1192 = vpop.f32.mrf.mxu0
        %v1193 = vadd.f32 0.0, %v1192
        %v1194 = vpop.f32.mrf.mxu0
        %1195 = vmatprep.mubr.bf16.mxu0 0
        %1196 = vmatmul.mubr.bf16.gmra.mxu0 %v951
        %v1197 = vpop.f32.mrf.mxu0
        %v1198 = vadd.f32 0.0, %v1197
        %v1199 = vpop.f32.mrf.mxu0
        %v1200 = vpop.f32.mrf.mxu0
        %v1201 = vadd.f32 0.0, %v1200
        %v1202 = vpop.f32.mrf.mxu0
        %1203 = vmatprep.mubr.bf16.mxu0 0
        %1204 = vmatmul.mubr.bf16.gmra.mxu0 %v952
        %v1205 = vpop.f32.mrf.mxu0
        %v1206 = vadd.f32 0.0, %v1205
        %v1207 = vpop.f32.mrf.mxu0
        %v1208 = vpop.f32.mrf.mxu0
        %v1209 = vadd.f32 0.0, %v1208
        %v1210 = vpop.f32.mrf.mxu0
        %1211 = vmatprep.mubr.bf16.mxu0 0
        %1212 = vmatmul.mubr.bf16.gmra.mxu0 %v953
        %v1213 = vpop.f32.mrf.mxu0
        %v1214 = vadd.f32 0.0, %v1213
        %v1215 = vpop.f32.mrf.mxu0
        %v1216 = vpop.f32.mrf.mxu0
        %v1217 = vadd.f32 0.0, %v1216
        %v1218 = vpop.f32.mrf.mxu0
        %1219 = vdwg.mxu0
        %v1220 = vmax.f32 %v1190, 0.0
        %v1221 = vmax.f32 %v1193, 0.0
        %v1222 = vmax.f32 %v1198, 0.0
        %v1223 = vmax.f32 %v1201, 0.0
        %v1224 = vmax.f32 %v1206, 0.0
        %v1225 = vmax.f32 %v1209, 0.0
        %v1226 = vmax.f32 %v1214, 0.0
        %v1227 = vmax.f32 %v1217, 0.0
        %v1228 = vadd.f32 %v1083, %v1084
        %v1229 = vrot.slane %v1228, 4
        %v1230 = vadd.f32 %v1228, %v1229
        %v1231 = vrot.slane %v1230, 2
        %v1232 = vadd.f32 %v1230, %v1231
        %v1233 = vrot.slane %v1232, 1
        %v1234 = vadd.f32 %v1232, %v1233
        %v1235 = vadd.f32 %v1085, %v1086
        %v1236 = vrot.slane %v1235, 4
        %v1237 = vadd.f32 %v1235, %v1236
        %v1238 = vrot.slane %v1237, 2
        %v1239 = vadd.f32 %v1237, %v1238
        %v1240 = vrot.slane %v1239, 1
        %v1241 = vadd.f32 %v1239, %v1240
        %v1242 = vadd.f32 %v1087, %v1088
        %v1243 = vrot.slane %v1242, 4
        %v1244 = vadd.f32 %v1242, %v1243
        %v1245 = vrot.slane %v1244, 2
        %v1246 = vadd.f32 %v1244, %v1245
        %v1247 = vrot.slane %v1246, 1
        %v1248 = vadd.f32 %v1246, %v1247
        %v1249 = vadd.f32 %v1089, %v1090
        %v1250 = vrot.slane %v1249, 4
        %v1251 = vadd.f32 %v1249, %v1250
        %v1252 = vrot.slane %v1251, 2
        %v1253 = vadd.f32 %v1251, %v1252
        %v1254 = vrot.slane %v1253, 1
        %v1255 = vadd.f32 %v1253, %v1254
        %v1256 = vmul.f32 %v1234, 0.0625
        %v1257 = vmul.f32 %v1241, 0.0625
        %v1258 = vmul.f32 %v1248, 0.0625
        %v1259 = vmul.f32 %v1255, 0.0625
        %v1260 = vadd.f32 %v1220, %v1221
        %v1261 = vrot.slane %v1260, 4
        %v1262 = vadd.f32 %v1260, %v1261
        %v1263 = vrot.slane %v1262, 2
        %v1264 = vadd.f32 %v1262, %v1263
        %v1265 = vrot.slane %v1264, 1
        %v1266 = vadd.f32 %v1264, %v1265
        %v1267 = vadd.f32 %v1222, %v1223
        %v1268 = vrot.slane %v1267, 4
        %v1269 = vadd.f32 %v1267, %v1268
        %v1270 = vrot.slane %v1269, 2
        %v1271 = vadd.f32 %v1269, %v1270
        %v1272 = vrot.slane %v1271, 1
        %v1273 = vadd.f32 %v1271, %v1272
        %v1274 = vadd.f32 %v1224, %v1225
        %v1275 = vrot.slane %v1274, 4
        %v1276 = vadd.f32 %v1274, %v1275
        %v1277 = vrot.slane %v1276, 2
        %v1278 = vadd.f32 %v1276, %v1277
        %v1279 = vrot.slane %v1278, 1
        %v1280 = vadd.f32 %v1278, %v1279
        %v1281 = vadd.f32 %v1226, %v1227
        %v1282 = vrot.slane %v1281, 4
        %v1283 = vadd.f32 %v1281, %v1282
        %v1284 = vrot.slane %v1283, 2
        %v1285 = vadd.f32 %v1283, %v1284
        %v1286 = vrot.slane %v1285, 1
        %v1287 = vadd.f32 %v1285, %v1286
        %v1288 = vmul.f32 %v1266, 0.0625
        %v1289 = vmul.f32 %v1273, 0.0625
        %v1290 = vmul.f32 %v1280, 0.0625
        %v1291 = vmul.f32 %v1287, 0.0625
        %v1292 = vld [vmem:[%s377] sm:$0xf]
        %v1294 = vrot.slane %v1292, 1
        %v1295 = vrot.slane %v1292, 2
        %v1296 = vrot.slane %v1292, 3
        %v1301 = vmul.f32 %v1288, %v1292
        %v1302 = vmul.f32 %v1289, %v1294
        %v1303 = vmul.f32 %v1290, %v1295
        %v1304 = vmul.f32 %v1291, %v1296
        %v1305 = vadd.f32 %v1256, %v1301
        %v1306 = vadd.f32 %v1257, %v1302
        %v1307 = vadd.f32 %v1258, %v1303
        %v1308 = vadd.f32 %v1259, %v1304
        %v1313 = vrot.slane %v1306, 7
        %vm1314 = vcmask 1041409
        %v1315 = vsel %vm1314, %v1313, %v1305
        %v1316 = vrot.slane %v1307, 6
        %vm1317 = vcmask 1042434
        %v1318 = vsel %vm1317, %v1316, %v1315
        %v1319 = vrot.slane %v1308, 5
        %vm1320 = vcmask 1043459
        %v1321 = vsel %vm1320, %v1319, %v1318
        %1323 = vst [vmem:[%s364] sm:$0xf] %v1321
        %v1324 = vsub.f32 %v1305, %v1256
        %v1325 = vsub.f32 %v1306, %v1257
        %v1326 = vsub.f32 %v1307, %v1258
        %v1327 = vsub.f32 %v1308, %v1259
        %v1328 = vadd.f32 %v1288, 1e-20
        %v1329 = vadd.f32 %v1289, 1e-20
        %v1330 = vadd.f32 %v1290, 1e-20
        %v1331 = vadd.f32 %v1291, 1e-20
        %v1332 = vrcp.pop %v1328
        %v1333 = vmul.f32 %v1324, %v1332
        %v1334 = vrcp.pop %v1329
        %v1335 = vmul.f32 %v1325, %v1334
        %v1336 = vrcp.pop %v1330
        %v1337 = vmul.f32 %v1326, %v1336
        %v1338 = vrcp.pop %v1331
        %v1339 = vmul.f32 %v1327, %v1338
        %v1340 = vmul.f32 %v1333, %v1333
        %v1341 = vmul.f32 %v1335, %v1335
        %v1342 = vmul.f32 %v1337, %v1337
        %v1343 = vmul.f32 %v1339, %v1339
        %v1344 = vmul.f32 %v1340, -0.5
        %v1345 = vmul.f32 %v1341, -0.5
        %v1346 = vmul.f32 %v1342, -0.5
        %v1347 = vmul.f32 %v1343, -0.5
        %v1348 = vlog2.pop %v1328
        %v1349 = vmul.f32 %v1348, 0.6931472
        %v1350 = vlog2.pop %v1329
        %v1351 = vmul.f32 %v1350, 0.6931472
        %v1352 = vlog2.pop %v1330
        %v1353 = vmul.f32 %v1352, 0.6931472
        %v1354 = vlog2.pop %v1331
        %v1355 = vmul.f32 %v1354, 0.6931472
        %v1356 = vsub.f32 %v1344, %v1349
        %v1357 = vsub.f32 %v1345, %v1351
        %v1358 = vsub.f32 %v1346, %v1353
        %v1359 = vsub.f32 %v1347, %v1355
        %v1360 = vmul.f32 %v1305, %v1305
        %v1361 = vmul.f32 %v1306, %v1306
        %v1362 = vmul.f32 %v1307, %v1307
        %v1363 = vmul.f32 %v1308, %v1308
        %v1364 = vmul.f32 %v1360, -0.5
        %v1365 = vmul.f32 %v1361, -0.5
        %v1366 = vmul.f32 %v1362, -0.5
        %v1367 = vmul.f32 %v1363, -0.5
        %v1368 = vsub.f32 %v1356, %v1364
        %v1369 = vsub.f32 %v1357, %v1365
        %v1370 = vsub.f32 %v1358, %v1366
        %v1371 = vsub.f32 %v1359, %v1367
        %v1372 = vlaneseq
        %v1373 = vand.u32 %v1372, 127
        %vm1374 = vcmp.lt.s32.totalorder %v1373, 32
        %v1379 = vrot.slane %v1369, 7
        %v1380 = vsel %vm1314, %v1379, %v1368
        %v1381 = vrot.slane %v1370, 6
        %v1382 = vsel %vm1317, %v1381, %v1380
        %v1383 = vrot.slane %v1371, 5
        %v1384 = vsel %vm1320, %v1383, %v1382
        %v1386 = vsel %vm1374, %v1384, 0.0
        %vm1387 = vcmask 1043456
        %v1388 = vsel %vm1387, %v1386, 0.0
        %1389 = vadd.xlane.f32.xlu0 %v1388
        %v1390 = vpop.xlane.xlu0 %1389
        %v1391 = vsel %vm1387, %v1390, 0.0
        %v1392 = vrot.slane %v1391, 4
        %v1393 = vadd.f32 %v1391, %v1392
        %v1394 = vrot.slane %v1393, 2
        %v1395 = vadd.f32 %v1393, %v1394
        %v1396 = vrot.slane %v1395, 1
        %v1397 = vadd.f32 %v1395, %v1396
        %v1398 = vadd.f32 %v1397, 0.0
        %1399 = vst [vmem:[%s380] sm:$0x1] %v1398
        %s1400 = sand.u32 %s232, 1
        %s1401 = scalar_lea.sflag [#allocation3], %s1400
        %s1402 = sand.u32 %s232, 1
        %s1403 = smul.addr %s1402, 4
        %s1404 = scalar_lea.vmem [#allocation2], %s1403
        %p1405 = scmp.lt.s32.totalorder %s25, 1
        %s1406 = scalar_select %p1405, %s25, 1
        %s1407 = scalar_lea.vmem %s10, %s1406
        // Predicated region
        $region57: #{encoder_forward.1} parent=55 // pred_check
          %p1408 = pneg %p242
        $region58: #{encoder_forward.1} parent=55 // pred_check_branch
          %1410 = sbr.rel (%p1408) target = $region60
        $region59: #{encoder_forward.1} parent=55 // pred_region
          %s1412 = ssub.s32 64, 64
          %1413 = vsyncadd %s1401, %s1412
          %s1414 = smul.addr %s25, 64
          %s1415 = scalar_lea.hbm %s9, %s1414
          %s1417 = sshll.u32 %s1404, 4
          %s1418 = int_to_ptr.vmem [resolvable:$true] %s1417
          %1420 = dma.vmem_to_hbm [thread:$0]  %s1418, 64, %s1415, %s1401
        $region60: #{encoder_forward.1} parent=55 // pred_fallthru
          _
        // Predicated region
        $region61: #{encoder_forward.1} parent=55 // pred_check
          %p1421 = pneg %p268
        $region62: #{encoder_forward.1} parent=55 // pred_check_branch
          %1423 = sbr.rel (%p1421) target = $region64
        $region63: #{encoder_forward.1} parent=55 // pred_region
          _
        $region64: #{encoder_forward.1} parent=55 // pred_fallthru
          _
      $region56: #{encoder_forward.1} parent=5 // pred_fallthru
        _
      %p1424 = scmp.le.s32.totalorder 2, %s20
      // Predicated region
      $region65: #{encoder_forward.1} parent=5 // pred_check
        %p1425 = pneg %p1424
      $region66: #{encoder_forward.1} parent=5 // pred_check_branch
        %1427 = sbr.rel (%p1425) target = $region68
      $region67: #{encoder_forward.1} parent=5 // pred_region
        %s1428 = ssub.s32 %s20, 2
        // Predicated region
        $region69: #{encoder_forward.1} parent=67 // pred_check
          %p1429 = pneg %p248
        $region70: #{encoder_forward.1} parent=67 // pred_check_branch
          %1431 = sbr.rel (%p1429) target = $region72
        $region71: #{encoder_forward.1} parent=67 // pred_region
          %s1432 = sand.u32 %s233, 1
          %s1433 = scalar_lea.sflag [#allocation3], %s1432
          %s1434 = sand.u32 %s233, 1
          %s1435 = smul.addr %s1434, 4
          %s1436 = scalar_lea.vmem [#allocation2], %s1435
          %1437 = dma.done %s1433, 64
        $region72: #{encoder_forward.1} parent=67 // pred_fallthru
          _
        // Predicated region
        $region73: #{encoder_forward.1} parent=67 // pred_check
          %p1438 = pneg %p274
        $region74: #{encoder_forward.1} parent=67 // pred_check_branch
          %1440 = sbr.rel (%p1438) target = $region76
        $region75: #{encoder_forward.1} parent=67 // pred_region
          %p1441 = scmp.lt.s32.totalorder %s26, 1
          %s1442 = scalar_select %p1441, %s26, 1
          %s1443 = scalar_lea.vmem %s10, %s1442
        $region76: #{encoder_forward.1} parent=67 // pred_fallthru
          _
      $region68: #{encoder_forward.1} parent=5 // pred_fallthru
        _
    $region6: #{encoder_forward.1} parent=1 // loop_footer
      %s24 = sadd.s32 1, %s20
    $region7: #{encoder_forward.1} parent=1 // loop_footer_branch
      %19 = sbr.rel target = $region3
    $region8: #{encoder_forward.1} parent=1 // loop_exit
      _
    %1444 = vsyncpa [#allocation3], 1
    %s1445 = scalar_lea.sflag [#allocation3], 1
    %1446 = vsyncpa %s1445, 1

</llo_original>
